<compile_context>
chip_gen: v5e
topology: v5e:2x2
jax: 0.10.0
libtpu: 0.0.40
codegen_flags: <defaults>
</compile_context>

<pallas_src>
import functools

import jax
import jax.numpy as jnp
from jax.experimental import pallas as pl
from jax.experimental.pallas import tpu as pltpu


def _round_up(v, m):
    return pl.cdiv(v, m) * m


def _mish(x, *, refine):
    # mish(x) = x * tanh(softplus(x)) = x * n / (n + 2), with n = e*(e+2), e = exp(x).
    # Clamping exp's argument at 20 is the overflow guard: for x >= 20,
    # tanh(softplus(x)) == 1 in f32 already, so the clamped form is exact.
    e = jnp.exp(jnp.minimum(x, 20.0))
    n = e * (e + 2.0)
    d = n + 2.0
    r = pl.reciprocal(d, approx=True)       # EUP slot (nearly free)
    if refine:
        r = r * (2.0 - d * r)               # one Newton step -> ~f32 accurate
    return x * n * r


def basic_block_kernel(x_ref, w1_ref, b1_ref, w2_ref, b2_ref, o_ref, *, refine):
    x = x_ref[...]

    # Linear 1 (+ bias) + Mish. Operands are cast to the weight dtype (bf16 hits the
    # native MXU rate); accumulation and the epilogue stay in f32.
    h = jnp.dot(x.astype(w1_ref.dtype), w1_ref[...],
                preferred_element_type=jnp.float32)
    h = _mish(h + b1_ref[...].astype(jnp.float32), refine=refine)

    # Linear 2 (+ bias) + Mish.
    h = jnp.dot(h.astype(w2_ref.dtype), w2_ref[...],
                preferred_element_type=jnp.float32)
    h = _mish(h + b2_ref[...].astype(jnp.float32), refine=refine)

    # Residual, cast back to the output dtype.
    o_ref[...] = (h + x.astype(jnp.float32)).astype(o_ref.dtype)


def prepare_basic_block_params(w1, b1, w2, b2, *, param_dtype=None):
    """One-time (model-load) prep: pad the hidden dim to a lane-dense multiple of 128
    and optionally cast the weight matrices (e.g. to bf16 for native MXU throughput).
    Zero padding is exact: padded columns stay zero through both linears, Mish(0)=0,
    and the zero-padded residual, so slicing the result back is lossless.
    Biases stay in f32 — the bias/Mish/residual epilogue runs in f32 anyway."""
    H = w1.shape[0]
    Hp = _round_up(H, 128)
    ph = Hp - H
    if ph:
        w1 = jnp.pad(w1, ((0, ph), (0, ph)))
        w2 = jnp.pad(w2, ((0, ph), (0, ph)))
        b1 = jnp.pad(b1, ((0, 0), (0, ph)))
        b2 = jnp.pad(b2, ((0, 0), (0, ph)))
    if param_dtype is not None:
        w1 = w1.astype(param_dtype)
        w2 = w2.astype(param_dtype)
    return w1, b1, w2, b2


def basic_block(x, w1, b1, w2, b2, *, block_batch=512):
    """x: (B, H). w1/w2: (in, out) layout, either (H, H) or pre-padded (Hp, Hp);
    b1/b2: (1, H) or (1, Hp). Prefer pre-padding/casting once via
    prepare_basic_block_params — padding weights per call is pure HBM overhead."""
    B, H = x.shape
    itemsize = x.dtype.itemsize
    Hp = _round_up(H, 128)

    # Fallback: pad weights here only if the caller didn't prepare them.
    if w1.shape[0] != Hp:
        w1, b1, w2, b2 = prepare_basic_block_params(w1, b1, w2, b2)

    # Batch tile: >= 2 grid steps when the batch allows (so both v7x TensorCores get
    # work), rows a multiple of 8 (f32) / 16 (sub-32-bit), minimal batch padding.
    sub = 16 if itemsize < 4 else 8
    n_tiles = max(1, pl.cdiv(B, block_batch))
    if n_tiles == 1 and B > sub:
        n_tiles = 2
    TB = _round_up(pl.cdiv(B, n_tiles), sub)
    Bp = _round_up(B, TB)

    pad_b, pad_h = Bp - B, Hp - H
    if pad_b or pad_h:
        x = jnp.pad(x, ((0, pad_b), (0, pad_h)))

    grid = (Bp // TB,)
    refine = itemsize >= 4   # keep the Newton step only for f32-level output accuracy

    # VMEM budget: single-buffered weights/biases + double-buffered x/out tiles
    # + f32 intermediates. Capped by the actual chip VMEM capacity.
    w_bytes = Hp * Hp * (w1.dtype.itemsize + w2.dtype.itemsize)
    vmem_needed = (
        w_bytes                               # w1, w2 (Buffered(1) -> single copy)
        + 2 * Hp * b1.dtype.itemsize          # biases
        + 2 * 2 * TB * Hp * itemsize          # double-buffered x and out tiles
        + 3 * TB * Hp * 4                     # f32 intermediates
    )
    try:
        vmem_cap = int(pltpu.get_tpu_info().vmem_capacity_bytes)
    except Exception:
        vmem_cap = 64 * 1024 * 1024           # conservative (v7x per-TensorCore)
    vmem_limit_bytes = int(max(32 * 1024 * 1024,
                               min(int(0.85 * vmem_cap), 2 * vmem_needed)))

    cost = pl.CostEstimate(
        flops=4 * Bp * Hp * Hp,               # two (Bp,Hp) x (Hp,Hp) matmuls
        transcendentals=2 * Bp * Hp,          # one exp per element per Mish
        bytes_accessed=2 * Bp * Hp * itemsize + w_bytes + 2 * Hp * b1.dtype.itemsize,
    )

    resident = dict(pipeline_mode=pl.Buffered(1))   # grid-invariant: no double buffer

    out = pl.pallas_call(
        functools.partial(basic_block_kernel, refine=refine),
        out_shape=jax.ShapeDtypeStruct((Bp, Hp), x.dtype),
        grid_spec=pltpu.PrefetchScalarGridSpec(
            num_scalar_prefetch=0,
            grid=grid,
            in_specs=[
                pl.BlockSpec((TB, Hp), lambda i: (i, 0)),               # x: batch-tiled
                pl.BlockSpec((Hp, Hp), lambda i: (0, 0), **resident),   # w1: resident
                pl.BlockSpec((1, Hp), lambda i: (0, 0), **resident),    # b1
                pl.BlockSpec((Hp, Hp), lambda i: (0, 0), **resident),   # w2: resident
                pl.BlockSpec((1, Hp), lambda i: (0, 0), **resident),    # b2
            ],
            out_specs=pl.BlockSpec((TB, Hp), lambda i: (i, 0)),
        ),
        compiler_params=pltpu.CompilerParams(
            dimension_semantics=("parallel",),
            vmem_limit_bytes=vmem_limit_bytes,
        ),
        cost_estimate=cost,
    )(x, w1, b1, w2, b2)

    if pad_b or pad_h:
        out = out[:B, :H]
    return out


def reference(x, w1, b1, w2, b2):
    def mish(v):
        return v * jnp.tanh(jax.nn.softplus(v))
    h = mish(x @ w1 + b1)
    h = mish(h @ w2 + b2)
    return h + x


if __name__ == "__main__":
    key = jax.random.PRNGKey(0)

    # ---- Test 1: f32 weights, lane-dense H, two batch tiles -> strict tolerance ----
    B, H = 512, 128
    k_x, k_w1, k_b1, k_w2, k_b2 = jax.random.split(key, 5)
    bound = 1.0 / (H ** 0.5)   # roughly PyTorch Linear's U(-1/sqrt(H), 1/sqrt(H))
    x = jax.random.normal(k_x, (B, H), dtype=jnp.float32)
    w1 = jax.random.uniform(k_w1, (H, H), minval=-bound, maxval=bound, dtype=jnp.float32)
    b1 = jax.random.uniform(k_b1, (1, H), minval=-bound, maxval=bound, dtype=jnp.float32)
    w2 = jax.random.uniform(k_w2, (H, H), minval=-bound, maxval=bound, dtype=jnp.float32)
    b2 = jax.random.uniform(k_b2, (1, H), minval=-bound, maxval=bound, dtype=jnp.float32)

    out = jax.block_until_ready(basic_block(x, w1, b1, w2, b2))
    ref = reference(x, w1, b1, w2, b2)
    err = jnp.max(jnp.abs(out - ref))
    assert jnp.allclose(out, ref, atol=1e-4, rtol=1e-4), f"f32 path max abs err: {err}"

    # ---- Test 2: bf16 MXU operands (pre-padded/cast weights), padded H/B ----
    B2, H2 = 96, 96
    k_x2, k_w3, k_b3, k_w4, k_b4 = jax.random.split(jax.random.PRNGKey(1), 5)
    bound2 = 1.0 / (H2 ** 0.5)
    x2 = jax.random.normal(k_x2, (B2, H2), dtype=jnp.float32)
    w3 = jax.random.uniform(k_w3, (H2, H2), minval=-bound2, maxval=bound2, dtype=jnp.float32)
    b3 = jax.random.uniform(k_b3, (1, H2), minval=-bound2, maxval=bound2, dtype=jnp.float32)
    w4 = jax.random.uniform(k_w4, (H2, H2), minval=-bound2, maxval=bound2, dtype=jnp.float32)
    b4 = jax.random.uniform(k_b4, (1, H2), minval=-bound2, maxval=bound2, dtype=jnp.float32)

    prepped = prepare_basic_block_params(w3, b3, w4, b4, param_dtype=jnp.bfloat16)
    out2 = jax.block_until_ready(basic_block(x2, *prepped))
    ref2 = reference(x2, w3, b3, w4, b4)
    err2 = jnp.max(jnp.abs(out2 - ref2))
    assert jnp.allclose(out2, ref2, atol=5e-2, rtol=5e-2), f"bf16 path max abs err: {err2}"

    print("KERNEL_OK")
</pallas_src>

<mosaic_0001>
module attributes {stable_mosaic.version = 11 : i64} {
  func.func @basic_block_kernel(%arg0: i32, %arg1: memref<256x128xf32, #tpu.memory_space<vmem>>, %arg2: memref<128x128xf32, #tpu.memory_space<vmem>>, %arg3: memref<1x128xf32, #tpu.memory_space<vmem>>, %arg4: memref<128x128xf32, #tpu.memory_space<vmem>>, %arg5: memref<1x128xf32, #tpu.memory_space<vmem>>, %arg6: memref<256x128xf32, #tpu.memory_space<vmem>>) attributes {dimension_semantics = [#tpu.dimension_semantics<parallel>], iteration_bounds = array<i64: 2>, scalar_prefetch = 0 : i64, scratch_operands = 0 : i64, tpu.core_type = #tpu.core_type<tc>, window_params = [{transform_indices = @transform_0, window_bounds = array<i64: 256, 128>}, {pipeline_mode = #tpu.pipeline_mode<synchronous>, transform_indices = @transform_1, window_bounds = array<i64: 128, 128>}, {pipeline_mode = #tpu.pipeline_mode<synchronous>, transform_indices = @transform_2, window_bounds = array<i64: 1, 128>}, {pipeline_mode = #tpu.pipeline_mode<synchronous>, transform_indices = @transform_3, window_bounds = array<i64: 128, 128>}, {pipeline_mode = #tpu.pipeline_mode<synchronous>, transform_indices = @transform_4, window_bounds = array<i64: 1, 128>}, {transform_indices = @transform_5, window_bounds = array<i64: 256, 128>}]} {
    %c0 = arith.constant 0 : index
    %c0_0 = arith.constant 0 : index
    %0 = vector.load %arg1[%c0, %c0_0] : memref<256x128xf32, #tpu.memory_space<vmem>>, vector<256x128xf32>
    %c0_1 = arith.constant 0 : index
    %c0_2 = arith.constant 0 : index
    %1 = vector.load %arg2[%c0_1, %c0_2] : memref<128x128xf32, #tpu.memory_space<vmem>>, vector<128x128xf32>
    %cst = arith.constant dense<0.000000e+00> : vector<256x128xf32>
    %2 = tpu.matmul %0, %1, %cst {dimension_numbers = #tpu.dot_dimension_numbers<[1], [0], [0], [1], [0, 0, 1, 1], [], []>} : vector<256x128xf32>, vector<128x128xf32>, vector<256x128xf32> -> vector<256x128xf32>
    %c0_3 = arith.constant 0 : index
    %c0_4 = arith.constant 0 : index
    %3 = vector.load %arg3[%c0_3, %c0_4] : memref<1x128xf32, #tpu.memory_space<vmem>>, vector<1x128xf32>
    %4 = vector.broadcast %3 : vector<1x128xf32> to vector<256x128xf32>
    %5 = arith.addf %2, %4 : vector<256x128xf32>
    %cst_5 = arith.constant 2.000000e+01 : f32
    %6 = vector.broadcast %cst_5 : f32 to vector<256x128xf32>
    %7 = arith.minimumf %5, %6 : vector<256x128xf32>
    %8 = math.exp %7 : vector<256x128xf32>
    %cst_6 = arith.constant 2.000000e+00 : f32
    %9 = vector.broadcast %cst_6 : f32 to vector<256x128xf32>
    %10 = arith.addf %8, %9 : vector<256x128xf32>
    %11 = arith.mulf %8, %10 : vector<256x128xf32>
    %cst_7 = arith.constant 2.000000e+00 : f32
    %12 = vector.broadcast %cst_7 : f32 to vector<256x128xf32>
    %13 = arith.addf %11, %12 : vector<256x128xf32>
    %14 = tpu.reciprocal %13 {approx = true} : vector<256x128xf32> -> vector<256x128xf32>
    %15 = arith.mulf %13, %14 : vector<256x128xf32>
    %cst_8 = arith.constant 2.000000e+00 : f32
    %16 = vector.broadcast %cst_8 : f32 to vector<256x128xf32>
    %17 = arith.subf %16, %15 : vector<256x128xf32>
    %18 = arith.mulf %14, %17 : vector<256x128xf32>
    %19 = arith.mulf %5, %11 : vector<256x128xf32>
    %20 = arith.mulf %19, %18 : vector<256x128xf32>
    %c0_9 = arith.constant 0 : index
    %c0_10 = arith.constant 0 : index
    %21 = vector.load %arg4[%c0_9, %c0_10] : memref<128x128xf32, #tpu.memory_space<vmem>>, vector<128x128xf32>
    %cst_11 = arith.constant dense<0.000000e+00> : vector<256x128xf32>
    %22 = tpu.matmul %20, %21, %cst_11 {dimension_numbers = #tpu.dot_dimension_numbers<[1], [0], [0], [1], [0, 0, 1, 1], [], []>} : vector<256x128xf32>, vector<128x128xf32>, vector<256x128xf32> -> vector<256x128xf32>
    %c0_12 = arith.constant 0 : index
    %c0_13 = arith.constant 0 : index
    %23 = vector.load %arg5[%c0_12, %c0_13] : memref<1x128xf32, #tpu.memory_space<vmem>>, vector<1x128xf32>
    %24 = vector.broadcast %23 : vector<1x128xf32> to vector<256x128xf32>
    %25 = arith.addf %22, %24 : vector<256x128xf32>
    %cst_14 = arith.constant 2.000000e+01 : f32
    %26 = vector.broadcast %cst_14 : f32 to vector<256x128xf32>
    %27 = arith.minimumf %25, %26 : vector<256x128xf32>
    %28 = math.exp %27 : vector<256x128xf32>
    %cst_15 = arith.constant 2.000000e+00 : f32
    %29 = vector.broadcast %cst_15 : f32 to vector<256x128xf32>
    %30 = arith.addf %28, %29 : vector<256x128xf32>
    %31 = arith.mulf %28, %30 : vector<256x128xf32>
    %cst_16 = arith.constant 2.000000e+00 : f32
    %32 = vector.broadcast %cst_16 : f32 to vector<256x128xf32>
    %33 = arith.addf %31, %32 : vector<256x128xf32>
    %34 = tpu.reciprocal %33 {approx = true} : vector<256x128xf32> -> vector<256x128xf32>
    %35 = arith.mulf %33, %34 : vector<256x128xf32>
    %cst_17 = arith.constant 2.000000e+00 : f32
    %36 = vector.broadcast %cst_17 : f32 to vector<256x128xf32>
    %37 = arith.subf %36, %35 : vector<256x128xf32>
    %38 = arith.mulf %34, %37 : vector<256x128xf32>
    %39 = arith.mulf %25, %31 : vector<256x128xf32>
    %40 = arith.mulf %39, %38 : vector<256x128xf32>
    %41 = arith.addf %40, %0 : vector<256x128xf32>
    %c0_18 = arith.constant 0 : index
    %c0_19 = arith.constant 0 : index
    %42 = vector.load %arg6[%c0_18, %c0_19] : memref<256x128xf32, #tpu.memory_space<vmem>>, vector<256x128xf32>
    tpu.vector_store %arg6[%c0_18, %c0_19], %41 {strides = array<i32>} : memref<256x128xf32, #tpu.memory_space<vmem>>, vector<256x128xf32>,
    return
  }
  func.func @transform_0(%arg0: i32) -> (i32, i32) {
    %c0_i32 = arith.constant 0 : i32
    %c0_i32_0 = arith.constant 0 : i32
    return %arg0, %c0_i32 : i32, i32
  }
  func.func @transform_1(%arg0: i32) -> (i32, i32) {
    %c0_i32 = arith.constant 0 : i32
    %c0_i32_0 = arith.constant 0 : i32
    %c0_i32_1 = arith.constant 0 : i32
    return %c0_i32, %c0_i32_0 : i32, i32
  }
  func.func @transform_2(%arg0: i32) -> (i32, i32) {
    %c0_i32 = arith.constant 0 : i32
    %c0_i32_0 = arith.constant 0 : i32
    %c0_i32_1 = arith.constant 0 : i32
    return %c0_i32, %c0_i32_0 : i32, i32
  }
  func.func @transform_3(%arg0: i32) -> (i32, i32) {
    %c0_i32 = arith.constant 0 : i32
    %c0_i32_0 = arith.constant 0 : i32
    %c0_i32_1 = arith.constant 0 : i32
    return %c0_i32, %c0_i32_0 : i32, i32
  }
  func.func @transform_4(%arg0: i32) -> (i32, i32) {
    %c0_i32 = arith.constant 0 : i32
    %c0_i32_0 = arith.constant 0 : i32
    %c0_i32_1 = arith.constant 0 : i32
    return %c0_i32, %c0_i32_0 : i32, i32
  }
  func.func @transform_5(%arg0: i32) -> (i32, i32) {
    %c0_i32 = arith.constant 0 : i32
    %c0_i32_0 = arith.constant 0 : i32
    return %arg0, %c0_i32 : i32, i32
  }
}

</mosaic_0001>

<llo_original>
// kernel: tpu_custom_call.1
$region0: #{tpu_custom_call.1}
  #allocation0 [shape = 'u32[]', space=smem, size = 0x4, offset = 0x4, fixed_abs, tag = 'smem constant byte address 0x4 - core index']
  #allocation1 [shape = 'u32[72,128]{1,0:T(1,128)}', space=vmem, size = 0x9000, scoped, tag = 'internal scratch']
  %s0 = inlined_call_operand.hbm [shape: f32[512,128], index: 0, kind: input, shape index: {}]
  %s1 = inlined_call_operand.hbm [shape: f32[128,128], index: 1, kind: input, shape index: {}]
  %s2 = inlined_call_operand.vmem [shape: f32[1,128], index: 2, kind: input, shape index: {}]
  %s3 = inlined_call_operand.hbm [shape: f32[128,128], index: 3, kind: input, shape index: {}]
  %s4 = inlined_call_operand.vmem [shape: f32[1,128], index: 4, kind: input, shape index: {}]
  %s5 = inlined_call_operand.hbm [shape: f32[512,128], index: 5, kind: output, shape index: {}]
  %s6 = sld [smem:[#allocation0]]
  $region65: #{tpu_custom_call.1} parent=0
    _
  %s8 = ssub.s32 1, %s6
  %s9 = scalar_select 0, %s8, %s6
  $region1: #{tpu_custom_call.1} parent=0
    #allocation2 [shape = 'u8[262144]{0}', space=vmem, size = 0x40000, scoped, tag = 'input window, operand 0']
    #allocation3 [shape = 's32[2]{0}', space=sflag, size = 0x8, scoped, tag = 'scoped memory for tpu_custom_call.1']
    #allocation4 [shape = 's32[2]{0}', space=sflag, size = 0x8, scoped, tag = 'scoped memory for tpu_custom_call.1']
    #allocation5 [shape = 'u8[65536]{0}', space=vmem, size = 0x10000, scoped, tag = 'input window, operand 1, single buffered']
    #allocation6 [shape = 's32[1]{0}', space=sflag, size = 0x4, scoped, tag = 'scoped memory for tpu_custom_call.1']
    #allocation7 [shape = 'u8[65536]{0}', space=vmem, size = 0x10000, scoped, tag = 'input window, operand 3, single buffered']
    #allocation8 [shape = 'u8[262144]{0}', space=vmem, size = 0x40000, scoped, tag = 'output window, operand 0']
    %10 = vsyncpa [#allocation3], 0
    %s11 = scalar_lea.sflag [#allocation3], 1
    %12 = vsyncpa %s11, 0
    %13 = vsyncpa [#allocation6], 0
    %14 = vsyncpa [#allocation4], 0
    %s15 = scalar_lea.sflag [#allocation4], 1
    %16 = vsyncpa %s15, 0
    loop: start=0, step=1, limit=4
    $region2: #{tpu_custom_call.1} parent=1 // loop_pre_header
      _
    $region3: #{tpu_custom_call.1} parent=1 // loop_header
      %s18 = sphi 0, %s22
      %p19 = scmp.ge.s32.totalorder %s18, 4
      %s28 = sphi 0, %s30
      %s31 = sphi 0, %s28
      %s32 = sphi 0, %s31
      %s48 = sphi 0, %s32
      %s52 = sphi 0, %s52
      %s54 = sphi 0, %s52
      %s55 = sphi 0, %s54
      %s69 = sphi 0, %s55
      %s73 = sphi 0, %s73
      %s75 = sphi 0, %s73
      %s76 = sphi 0, %s75
      %s90 = sphi 0, %s76
      %s94 = sphi 0, %s94
      %s96 = sphi 0, %s94
      %s97 = sphi 0, %s96
      %s111 = sphi 0, %s97
      %s115 = sphi 0, %s115
      %s117 = sphi 0, %s115
      %s118 = sphi 0, %s117
      %s132 = sphi 0, %s118
      %s138 = sphi 0, %s140
      %s141 = sphi 0, %s138
      %s142 = sphi 0, %s141
      %s158 = sphi 0, %s142
    $region4: #{tpu_custom_call.1} parent=1 // loop_header_branch
      %21 = sbr.rel (%p19) target = $region8
    $region5: #{tpu_custom_call.1} parent=1 // loop_body
      %s23 = ssub.s32 %s18, 1
      %s24 = ssub.s32 %s18, 2
      %s25 = sadd.s32 %s18, 1
      %s26 = ssub.s32 %s18, %s25
      %p27 = scmp.eq.s32.totalorder %s26, 0
      %s29 = sadd.s32 %s28, 1
      %s30 = scalar_select %p27, %s28, %s29
      %p33 = pneg %p27
      %p34 = scmp.eq.s32.totalorder %s18, 1
      %p35 = por %p33, %p34
      %p36 = scmp.ne.s32.totalorder %s28, %s31
      %p37 = scmp.eq.s32.totalorder %s18, 0
      %p38 = por %p36, %p37
      %p39 = scmp.ne.s32.totalorder %s28, %s31
      %p40 = scmp.eq.s32.totalorder %s23, 1
      %p41 = por %p39, %p40
      %p42 = scmp.ne.s32.totalorder %s31, %s32
      %p43 = scmp.eq.s32.totalorder %s23, 0
      %p44 = por %p42, %p43
      %p45 = scmp.ne.s32.totalorder %s31, %s32
      %p46 = scmp.eq.s32.totalorder %s24, 1
      %p47 = por %p45, %p46
      %p49 = scmp.ne.s32.totalorder %s32, %s48
      %p50 = scmp.eq.s32.totalorder %s24, 0
      %p51 = por %p49, %p50
      %s53 = sadd.s32 %s52, 1
      %p56 = scmp.eq.s32.totalorder %s18, 1
      %p57 = scmp.ne.s32.totalorder %s52, %s54
      %p58 = scmp.eq.s32.totalorder %s18, 0
      %p59 = por %p57, %p58
      %p60 = scmp.ne.s32.totalorder %s52, %s54
      %p61 = scmp.eq.s32.totalorder %s23, 1
      %p62 = por %p60, %p61
      %p63 = scmp.ne.s32.totalorder %s54, %s55
      %p64 = scmp.eq.s32.totalorder %s23, 0
      %p65 = por %p63, %p64
      %p66 = scmp.ne.s32.totalorder %s54, %s55
      %p67 = scmp.eq.s32.totalorder %s24, 1
      %p68 = por %p66, %p67
      %p70 = scmp.ne.s32.totalorder %s55, %s69
      %p71 = scmp.eq.s32.totalorder %s24, 0
      %p72 = por %p70, %p71
      %s74 = sadd.s32 %s73, 1
      %p77 = scmp.eq.s32.totalorder %s18, 1
      %p78 = scmp.ne.s32.totalorder %s73, %s75
      %p79 = scmp.eq.s32.totalorder %s18, 0
      %p80 = por %p78, %p79
      %p81 = scmp.ne.s32.totalorder %s73, %s75
      %p82 = scmp.eq.s32.totalorder %s23, 1
      %p83 = por %p81, %p82
      %p84 = scmp.ne.s32.totalorder %s75, %s76
      %p85 = scmp.eq.s32.totalorder %s23, 0
      %p86 = por %p84, %p85
      %p87 = scmp.ne.s32.totalorder %s75, %s76
      %p88 = scmp.eq.s32.totalorder %s24, 1
      %p89 = por %p87, %p88
      %p91 = scmp.ne.s32.totalorder %s76, %s90
      %p92 = scmp.eq.s32.totalorder %s24, 0
      %p93 = por %p91, %p92
      %s95 = sadd.s32 %s94, 1
      %p98 = scmp.eq.s32.totalorder %s18, 1
      %p99 = scmp.ne.s32.totalorder %s94, %s96
      %p100 = scmp.eq.s32.totalorder %s18, 0
      %p101 = por %p99, %p100
      %p102 = scmp.ne.s32.totalorder %s94, %s96
      %p103 = scmp.eq.s32.totalorder %s23, 1
      %p104 = por %p102, %p103
      %p105 = scmp.ne.s32.totalorder %s96, %s97
      %p106 = scmp.eq.s32.totalorder %s23, 0
      %p107 = por %p105, %p106
      %p108 = scmp.ne.s32.totalorder %s96, %s97
      %p109 = scmp.eq.s32.totalorder %s24, 1
      %p110 = por %p108, %p109
      %p112 = scmp.ne.s32.totalorder %s97, %s111
      %p113 = scmp.eq.s32.totalorder %s24, 0
      %p114 = por %p112, %p113
      %s116 = sadd.s32 %s115, 1
      %p119 = scmp.eq.s32.totalorder %s18, 1
      %p120 = scmp.ne.s32.totalorder %s115, %s117
      %p121 = scmp.eq.s32.totalorder %s18, 0
      %p122 = por %p120, %p121
      %p123 = scmp.ne.s32.totalorder %s115, %s117
      %p124 = scmp.eq.s32.totalorder %s23, 1
      %p125 = por %p123, %p124
      %p126 = scmp.ne.s32.totalorder %s117, %s118
      %p127 = scmp.eq.s32.totalorder %s23, 0
      %p128 = por %p126, %p127
      %p129 = scmp.ne.s32.totalorder %s117, %s118
      %p130 = scmp.eq.s32.totalorder %s24, 1
      %p131 = por %p129, %p130
      %p133 = scmp.ne.s32.totalorder %s118, %s132
      %p134 = scmp.eq.s32.totalorder %s24, 0
      %p135 = por %p133, %p134
      %s136 = ssub.s32 %s18, %s25
      %p137 = scmp.eq.s32.totalorder %s136, 0
      %s139 = sadd.s32 %s138, 1
      %s140 = scalar_select %p137, %s138, %s139
      %p143 = pneg %p137
      %p144 = scmp.eq.s32.totalorder %s18, 1
      %p145 = por %p143, %p144
      %p146 = scmp.ne.s32.totalorder %s138, %s141
      %p147 = scmp.eq.s32.totalorder %s18, 0
      %p148 = por %p146, %p147
      %p149 = scmp.ne.s32.totalorder %s138, %s141
      %p150 = scmp.eq.s32.totalorder %s23, 1
      %p151 = por %p149, %p150
      %p152 = scmp.ne.s32.totalorder %s141, %s142
      %p153 = scmp.eq.s32.totalorder %s23, 0
      %p154 = por %p152, %p153
      %p155 = scmp.ne.s32.totalorder %s141, %s142
      %p156 = scmp.eq.s32.totalorder %s24, 1
      %p157 = por %p155, %p156
      %p159 = scmp.ne.s32.totalorder %s142, %s158
      %p160 = scmp.eq.s32.totalorder %s24, 0
      %p161 = por %p159, %p160
      %p162 = scmp.le.s32.totalorder 1, %s18
      %p163 = scmp.lt.s32.totalorder %s18, 3
      %p164 = pnand %p162, %p163
      %p165 = pneg %p164
      // Predicated region
      $region9: #{tpu_custom_call.1} parent=5 // pred_check
        _
      $region10: #{tpu_custom_call.1} parent=5 // pred_check_branch
        %167 = sbr.rel (%p164) target = $region12
      $region11: #{tpu_custom_call.1} parent=5 // pred_region
        %s168 = ssub.s32 %s18, 1
        // Predicated region
        $region13: #{tpu_custom_call.1} parent=11 // pred_check
          %p169 = pneg %p65
        $region14: #{tpu_custom_call.1} parent=11 // pred_check_branch
          %171 = sbr.rel (%p169) target = $region16
        $region15: #{tpu_custom_call.1} parent=11 // pred_region
          %173 = vsyncadd [#allocation6], 0
          %s174 = sshll.u32 %s1, 4
          %s175 = int_to_ptr.hbm [resolvable:$true] %s174
          %s176 = sshll.u32 [#allocation5], 4
          %s177 = int_to_ptr.vmem [resolvable:$true] %s176
          %182 = dma.hbm_to_vmem [thread:$0]  %s175, 2048, %s177, [#allocation6], 128, 128, 8
        $region16: #{tpu_custom_call.1} parent=11 // pred_fallthru
          _
        // Predicated region
        $region17: #{tpu_custom_call.1} parent=11 // pred_check
          %p183 = pneg %p86
        $region18: #{tpu_custom_call.1} parent=11 // pred_check_branch
          %185 = sbr.rel (%p183) target = $region20
        $region19: #{tpu_custom_call.1} parent=11 // pred_region
          _
        $region20: #{tpu_custom_call.1} parent=11 // pred_fallthru
          _
        // Predicated region
        $region21: #{tpu_custom_call.1} parent=11 // pred_check
          %p186 = pneg %p107
        $region22: #{tpu_custom_call.1} parent=11 // pred_check_branch
          %188 = sbr.rel (%p186) target = $region24
        $region23: #{tpu_custom_call.1} parent=11 // pred_region
          %190 = vsyncadd [#allocation6], 0
          %s191 = sshll.u32 %s3, 4
          %s192 = int_to_ptr.hbm [resolvable:$true] %s191
          %s193 = sshll.u32 [#allocation7], 4
          %s194 = int_to_ptr.vmem [resolvable:$true] %s193
          %199 = dma.hbm_to_vmem [thread:$0]  %s192, 2048, %s194, [#allocation6], 128, 128, 8
        $region24: #{tpu_custom_call.1} parent=11 // pred_fallthru
          _
        // Predicated region
        $region25: #{tpu_custom_call.1} parent=11 // pred_check
          %p200 = pneg %p128
        $region26: #{tpu_custom_call.1} parent=11 // pred_check_branch
          %202 = sbr.rel (%p200) target = $region28
        $region27: #{tpu_custom_call.1} parent=11 // pred_region
          _
        $region28: #{tpu_custom_call.1} parent=11 // pred_fallthru
          _
      $region12: #{tpu_custom_call.1} parent=5 // pred_fallthru
        _
      %p203 = scmp.lt.s32.totalorder %s18, 2
      // Predicated region
      $region29: #{tpu_custom_call.1} parent=5 // pred_check
        %p204 = pneg %p203
      $region30: #{tpu_custom_call.1} parent=5 // pred_check_branch
        %206 = sbr.rel (%p204) target = $region32
      $region31: #{tpu_custom_call.1} parent=5 // pred_region
        // Predicated region
        $region33: #{tpu_custom_call.1} parent=31 // pred_check
          %p207 = pneg %p38
        $region34: #{tpu_custom_call.1} parent=31 // pred_check_branch
          %209 = sbr.rel (%p207) target = $region36
        $region35: #{tpu_custom_call.1} parent=31 // pred_region
          %s210 = sand.u32 %s28, 1
          %s211 = scalar_lea.sflag [#allocation3], %s210
          %s212 = sand.u32 %s28, 1
          %s213 = smul.addr %s212, 256
          %s214 = scalar_lea.vmem [#allocation2], %s213
          %s215 = smul.u32 32, %s18
          %217 = vsyncadd %s211, 0
          %s218 = smul.addr %s215, 8
          %s219 = scalar_lea.hbm %s0, %s218
          %s220 = sshll.u32 %s219, 4
          %s221 = int_to_ptr.hbm [resolvable:$true] %s220
          %s222 = sshll.u32 %s214, 4
          %s223 = int_to_ptr.vmem [resolvable:$true] %s222
          %228 = dma.hbm_to_vmem [thread:$0]  %s221, 4096, %s223, %s211, 128, 128, 8
        $region36: #{tpu_custom_call.1} parent=31 // pred_fallthru
          _
      $region32: #{tpu_custom_call.1} parent=5 // pred_fallthru
        _
      %p229 = scmp.le.s32.totalorder 1, %s18
      %p230 = scmp.lt.s32.totalorder %s18, 3
      %p231 = pnand %p229, %p230
      %p232 = pneg %p231
      // Predicated region
      $region37: #{tpu_custom_call.1} parent=5 // pred_check
        _
      $region38: #{tpu_custom_call.1} parent=5 // pred_check_branch
        %234 = sbr.rel (%p231) target = $region40
      $region39: #{tpu_custom_call.1} parent=5 // pred_region
        %s235 = ssub.s32 %s18, 1
        %s236 = sand.u32 %s31, 1
        %s237 = scalar_lea.sflag [#allocation3], %s236
        %s238 = sand.u32 %s31, 1
        %s239 = smul.addr %s238, 256
        %s240 = scalar_lea.vmem [#allocation2], %s239
        // Predicated region
        $region41: #{tpu_custom_call.1} parent=39 // pred_check
          %p241 = pneg %p44
        $region42: #{tpu_custom_call.1} parent=39 // pred_check_branch
          %243 = sbr.rel (%p241) target = $region44
        $region43: #{tpu_custom_call.1} parent=39 // pred_region
          %245 = dma.done %s237, 4096
        $region44: #{tpu_custom_call.1} parent=39 // pred_fallthru
          _
        // Predicated region
        $region45: #{tpu_custom_call.1} parent=39 // pred_check
          %p246 = pneg %p65
        $region46: #{tpu_custom_call.1} parent=39 // pred_check_branch
          %248 = sbr.rel (%p246) target = $region48
        $region47: #{tpu_custom_call.1} parent=39 // pred_region
          %250 = dma.done [#allocation6], 2048
        $region48: #{tpu_custom_call.1} parent=39 // pred_fallthru
          _
        // Predicated region
        $region49: #{tpu_custom_call.1} parent=39 // pred_check
          %p251 = pneg %p107
        $region50: #{tpu_custom_call.1} parent=39 // pred_check_branch
          %253 = sbr.rel (%p251) target = $region52
        $region51: #{tpu_custom_call.1} parent=39 // pred_region
          %255 = dma.done [#allocation6], 2048
        $region52: #{tpu_custom_call.1} parent=39 // pred_fallthru
          _
        %s256 = sand.u32 %s31, 1
        %s257 = scalar_lea.sflag [#allocation3], %s256
        %s258 = sand.u32 %s31, 1
        %s259 = smul.addr %s258, 256
        %s260 = scalar_lea.vmem [#allocation2], %s259
        %p261 = pneg %p44
        %p262 = pneg %p41
        %p263 = pneg %p65
        %p264 = pneg %p62
        %p265 = pneg %p86
        %p266 = pneg %p83
        %p267 = pneg %p107
        %p268 = pneg %p104
        %p269 = pneg %p128
        %p270 = pneg %p125
        %p271 = pneg %p154
        %p272 = pneg %p151
        %s273 = sand.u32 %s141, 1
        %s274 = scalar_lea.sflag [#allocation4], %s273
        %s275 = sand.u32 %s141, 1
        %s276 = smul.addr %s275, 256
        %s277 = scalar_lea.vmem [#allocation8], %s276
        %s278 = smul.u32 32, %s23
        %s279 = smul.u32 32, %s23
        %v280 = vld [vmem:[%s240] sm:$0xff]
        %v281 = vld [vmem:[%s240 + $0x8] sm:$0xff]
        %v282 = vld [vmem:[%s240 + $0x10] sm:$0xff]
        %v283 = vld [vmem:[%s240 + $0x18] sm:$0xff]
        %v284 = vld [vmem:[%s240 + $0x20] sm:$0xff]
        %v285 = vld [vmem:[%s240 + $0x28] sm:$0xff]
        %v286 = vld [vmem:[%s240 + $0x30] sm:$0xff]
        %v287 = vld [vmem:[%s240 + $0x38] sm:$0xff]
        %v288 = vld [vmem:[%s240 + $0x40] sm:$0xff]
        %v289 = vld [vmem:[%s240 + $0x48] sm:$0xff]
        %v290 = vld [vmem:[%s240 + $0x50] sm:$0xff]
        %v291 = vld [vmem:[%s240 + $0x58] sm:$0xff]
        %v292 = vld [vmem:[%s240 + $0x60] sm:$0xff]
        %v293 = vld [vmem:[%s240 + $0x68] sm:$0xff]
        %v294 = vld [vmem:[%s240 + $0x70] sm:$0xff]
        %v295 = vld [vmem:[%s240 + $0x78] sm:$0xff]
        %v296 = vld [vmem:[%s240 + $0x80] sm:$0xff]
        %v297 = vld [vmem:[%s240 + $0x88] sm:$0xff]
        %v298 = vld [vmem:[%s240 + $0x90] sm:$0xff]
        %v299 = vld [vmem:[%s240 + $0x98] sm:$0xff]
        %v300 = vld [vmem:[%s240 + $0xa0] sm:$0xff]
        %v301 = vld [vmem:[%s240 + $0xa8] sm:$0xff]
        %v302 = vld [vmem:[%s240 + $0xb0] sm:$0xff]
        %v303 = vld [vmem:[%s240 + $0xb8] sm:$0xff]
        %v304 = vld [vmem:[%s240 + $0xc0] sm:$0xff]
        %v305 = vld [vmem:[%s240 + $0xc8] sm:$0xff]
        %v306 = vld [vmem:[%s240 + $0xd0] sm:$0xff]
        %v307 = vld [vmem:[%s240 + $0xd8] sm:$0xff]
        %v308 = vld [vmem:[%s240 + $0xe0] sm:$0xff]
        %v309 = vld [vmem:[%s240 + $0xe8] sm:$0xff]
        %v310 = vld [vmem:[%s240 + $0xf0] sm:$0xff]
        %v311 = vld [vmem:[%s240 + $0xf8] sm:$0xff]
        %v312 = vld [vmem:[#allocation5] sm:$0xff]
        %v313 = vld [vmem:[#allocation5 + $0x8] sm:$0xff]
        %v314 = vld [vmem:[#allocation5 + $0x10] sm:$0xff]
        %v315 = vld [vmem:[#allocation5 + $0x18] sm:$0xff]
        %v316 = vld [vmem:[#allocation5 + $0x20] sm:$0xff]
        %v317 = vld [vmem:[#allocation5 + $0x28] sm:$0xff]
        %v318 = vld [vmem:[#allocation5 + $0x30] sm:$0xff]
        %v319 = vld [vmem:[#allocation5 + $0x38] sm:$0xff]
        %v320 = vld [vmem:[#allocation5 + $0x40] sm:$0xff]
        %v321 = vld [vmem:[#allocation5 + $0x48] sm:$0xff]
        %v322 = vld [vmem:[#allocation5 + $0x50] sm:$0xff]
        %v323 = vld [vmem:[#allocation5 + $0x58] sm:$0xff]
        %v324 = vld [vmem:[#allocation5 + $0x60] sm:$0xff]
        %v325 = vld [vmem:[#allocation5 + $0x68] sm:$0xff]
        %v326 = vld [vmem:[#allocation5 + $0x70] sm:$0xff]
        %v327 = vld [vmem:[#allocation5 + $0x78] sm:$0xff]
        %v328 = vld [vmem:[%s2] sm:$0x1]
        %v330 = vperm.slane %v328, 0
        %332 = vmatpush.msra.mxu0 %v327
        %333 = vmatpush.msra.mxu0 %v326
        %334 = vmatpush.msra.mxu0 %v325
        %335 = vmatpush.msra.mxu0 %v324
        %336 = vmatpush.msra.mxu0 %v323
        %337 = vmatpush.msra.mxu0 %v322
        %338 = vmatpush.msra.mxu0 %v321
        %339 = vmatpush.msra.mxu0 %v320
        %340 = vmatpush.msra.mxu0 %v319
        %341 = vmatpush.msra.mxu0 %v318
        %342 = vmatpush.msra.mxu0 %v317
        %343 = vmatpush.msra.mxu0 %v316
        %344 = vmatpush.msra.mxu0 %v315
        %345 = vmatpush.msra.mxu0 %v314
        %346 = vmatpush.msra.mxu0 %v313
        %347 = vmatpush.msra.mxu0 %v312
        %348 = vmatmul.f32.gmra.mxu0 %v280
        %v349 = vpop.f32.mrf.mxu0
        %v350 = vadd.f32 %v330, %v349
        %351 = vmatmul.f32.gmra.mxu0 %v281
        %v352 = vpop.f32.mrf.mxu0
        %v353 = vadd.f32 %v330, %v352
        %354 = vmatmul.f32.gmra.mxu0 %v282
        %v355 = vpop.f32.mrf.mxu0
        %v356 = vadd.f32 %v330, %v355
        %357 = vmatmul.f32.gmra.mxu0 %v283
        %v358 = vpop.f32.mrf.mxu0
        %v359 = vadd.f32 %v330, %v358
        %360 = vmatmul.f32.gmra.mxu0 %v284
        %v361 = vpop.f32.mrf.mxu0
        %v362 = vadd.f32 %v330, %v361
        %363 = vmatmul.f32.gmra.mxu0 %v285
        %v364 = vpop.f32.mrf.mxu0
        %v365 = vadd.f32 %v330, %v364
        %366 = vmatmul.f32.gmra.mxu0 %v286
        %v367 = vpop.f32.mrf.mxu0
        %v368 = vadd.f32 %v330, %v367
        %369 = vmatmul.f32.gmra.mxu0 %v287
        %v370 = vpop.f32.mrf.mxu0
        %v371 = vadd.f32 %v330, %v370
        %372 = vmatmul.f32.gmra.mxu0 %v288
        %v373 = vpop.f32.mrf.mxu0
        %v374 = vadd.f32 %v330, %v373
        %375 = vmatmul.f32.gmra.mxu0 %v289
        %v376 = vpop.f32.mrf.mxu0
        %v377 = vadd.f32 %v330, %v376
        %378 = vmatmul.f32.gmra.mxu0 %v290
        %v379 = vpop.f32.mrf.mxu0
        %v380 = vadd.f32 %v330, %v379
        %381 = vmatmul.f32.gmra.mxu0 %v291
        %v382 = vpop.f32.mrf.mxu0
        %v383 = vadd.f32 %v330, %v382
        %384 = vmatmul.f32.gmra.mxu0 %v292
        %v385 = vpop.f32.mrf.mxu0
        %v386 = vadd.f32 %v330, %v385
        %387 = vmatmul.f32.gmra.mxu0 %v293
        %v388 = vpop.f32.mrf.mxu0
        %v389 = vadd.f32 %v330, %v388
        %390 = vmatmul.f32.gmra.mxu0 %v294
        %v391 = vpop.f32.mrf.mxu0
        %v392 = vadd.f32 %v330, %v391
        %393 = vmatmul.f32.gmra.mxu0 %v295
        %v394 = vpop.f32.mrf.mxu0
        %v395 = vadd.f32 %v330, %v394
        %396 = vmatmul.f32.gmra.mxu0 %v296
        %v397 = vpop.f32.mrf.mxu0
        %v398 = vadd.f32 %v330, %v397
        %399 = vmatmul.f32.gmra.mxu0 %v297
        %v400 = vpop.f32.mrf.mxu0
        %v401 = vadd.f32 %v330, %v400
        %402 = vmatmul.f32.gmra.mxu0 %v298
        %v403 = vpop.f32.mrf.mxu0
        %v404 = vadd.f32 %v330, %v403
        %405 = vmatmul.f32.gmra.mxu0 %v299
        %v406 = vpop.f32.mrf.mxu0
        %v407 = vadd.f32 %v330, %v406
        %408 = vmatmul.f32.gmra.mxu0 %v300
        %v409 = vpop.f32.mrf.mxu0
        %v410 = vadd.f32 %v330, %v409
        %411 = vmatmul.f32.gmra.mxu0 %v301
        %v412 = vpop.f32.mrf.mxu0
        %v413 = vadd.f32 %v330, %v412
        %414 = vmatmul.f32.gmra.mxu0 %v302
        %v415 = vpop.f32.mrf.mxu0
        %v416 = vadd.f32 %v330, %v415
        %417 = vmatmul.f32.gmra.mxu0 %v303
        %v418 = vpop.f32.mrf.mxu0
        %v419 = vadd.f32 %v330, %v418
        %420 = vmatmul.f32.gmra.mxu0 %v304
        %v421 = vpop.f32.mrf.mxu0
        %v422 = vadd.f32 %v330, %v421
        %423 = vmatmul.f32.gmra.mxu0 %v305
        %v424 = vpop.f32.mrf.mxu0
        %v425 = vadd.f32 %v330, %v424
        %426 = vmatmul.f32.gmra.mxu0 %v306
        %v427 = vpop.f32.mrf.mxu0
        %v428 = vadd.f32 %v330, %v427
        %429 = vmatmul.f32.gmra.mxu0 %v307
        %v430 = vpop.f32.mrf.mxu0
        %v431 = vadd.f32 %v330, %v430
        %432 = vmatmul.f32.gmra.mxu0 %v308
        %v433 = vpop.f32.mrf.mxu0
        %v434 = vadd.f32 %v330, %v433
        %435 = vmatmul.f32.gmra.mxu0 %v309
        %v436 = vpop.f32.mrf.mxu0
        %v437 = vadd.f32 %v330, %v436
        %438 = vmatmul.f32.gmra.mxu0 %v310
        %v439 = vpop.f32.mrf.mxu0
        %v440 = vadd.f32 %v330, %v439
        %441 = vmatmul.f32.gmra.mxu0 %v311
        %v442 = vpop.f32.mrf.mxu0
        %v443 = vadd.f32 %v330, %v442
        %444 = vdwg.mxu0
        %v445 = vmin.f32 %v350, 20.0
        %v446 = vmin.f32 %v353, 20.0
        %v447 = vmin.f32 %v356, 20.0
        %v448 = vmin.f32 %v359, 20.0
        %v449 = vmin.f32 %v362, 20.0
        %v450 = vmin.f32 %v365, 20.0
        %v451 = vmin.f32 %v368, 20.0
        %v452 = vmin.f32 %v371, 20.0
        %v453 = vmin.f32 %v374, 20.0
        %v454 = vmin.f32 %v377, 20.0
        %v455 = vmin.f32 %v380, 20.0
        %v456 = vmin.f32 %v383, 20.0
        %v457 = vmin.f32 %v386, 20.0
        %v458 = vmin.f32 %v389, 20.0
        %v459 = vmin.f32 %v392, 20.0
        %v460 = vmin.f32 %v395, 20.0
        %v461 = vmin.f32 %v398, 20.0
        %v462 = vmin.f32 %v401, 20.0
        %v463 = vmin.f32 %v404, 20.0
        %v464 = vmin.f32 %v407, 20.0
        %v465 = vmin.f32 %v410, 20.0
        %v466 = vmin.f32 %v413, 20.0
        %v467 = vmin.f32 %v416, 20.0
        %v468 = vmin.f32 %v419, 20.0
        %v469 = vmin.f32 %v422, 20.0
        %v470 = vmin.f32 %v425, 20.0
        %v471 = vmin.f32 %v428, 20.0
        %v472 = vmin.f32 %v431, 20.0
        %v473 = vmin.f32 %v434, 20.0
        %v474 = vmin.f32 %v437, 20.0
        %v475 = vmin.f32 %v440, 20.0
        %v476 = vmin.f32 %v443, 20.0
        %v477 = vmul.f32 %v445, 1.442695
        %v478 = vpow.pop %v477
        %v479 = vmul.f32 %v446, 1.442695
        %v480 = vpow.pop %v479
        %v481 = vmul.f32 %v447, 1.442695
        %v482 = vpow.pop %v481
        %v483 = vmul.f32 %v448, 1.442695
        %v484 = vpow.pop %v483
        %v485 = vmul.f32 %v449, 1.442695
        %v486 = vpow.pop %v485
        %v487 = vmul.f32 %v450, 1.442695
        %v488 = vpow.pop %v487
        %v489 = vmul.f32 %v451, 1.442695
        %v490 = vpow.pop %v489
        %v491 = vmul.f32 %v452, 1.442695
        %v492 = vpow.pop %v491
        %v493 = vmul.f32 %v453, 1.442695
        %v494 = vpow.pop %v493
        %v495 = vmul.f32 %v454, 1.442695
        %v496 = vpow.pop %v495
        %v497 = vmul.f32 %v455, 1.442695
        %v498 = vpow.pop %v497
        %v499 = vmul.f32 %v456, 1.442695
        %v500 = vpow.pop %v499
        %v501 = vmul.f32 %v457, 1.442695
        %v502 = vpow.pop %v501
        %v503 = vmul.f32 %v458, 1.442695
        %v504 = vpow.pop %v503
        %v505 = vmul.f32 %v459, 1.442695
        %v506 = vpow.pop %v505
        %v507 = vmul.f32 %v460, 1.442695
        %v508 = vpow.pop %v507
        %v509 = vmul.f32 %v461, 1.442695
        %v510 = vpow.pop %v509
        %v511 = vmul.f32 %v462, 1.442695
        %v512 = vpow.pop %v511
        %v513 = vmul.f32 %v463, 1.442695
        %v514 = vpow.pop %v513
        %v515 = vmul.f32 %v464, 1.442695
        %v516 = vpow.pop %v515
        %v517 = vmul.f32 %v465, 1.442695
        %v518 = vpow.pop %v517
        %v519 = vmul.f32 %v466, 1.442695
        %v520 = vpow.pop %v519
        %v521 = vmul.f32 %v467, 1.442695
        %v522 = vpow.pop %v521
        %v523 = vmul.f32 %v468, 1.442695
        %v524 = vpow.pop %v523
        %v525 = vmul.f32 %v469, 1.442695
        %v526 = vpow.pop %v525
        %v527 = vmul.f32 %v470, 1.442695
        %v528 = vpow.pop %v527
        %v529 = vmul.f32 %v471, 1.442695
        %v530 = vpow.pop %v529
        %v531 = vmul.f32 %v472, 1.442695
        %v532 = vpow.pop %v531
        %v533 = vmul.f32 %v473, 1.442695
        %v534 = vpow.pop %v533
        %v535 = vmul.f32 %v474, 1.442695
        %v536 = vpow.pop %v535
        %v537 = vmul.f32 %v475, 1.442695
        %v538 = vpow.pop %v537
        %v539 = vmul.f32 %v476, 1.442695
        %v540 = vpow.pop %v539
        %v541 = vadd.f32 %v478, 2.0
        %v542 = vadd.f32 %v480, 2.0
        %v543 = vadd.f32 %v482, 2.0
        %v544 = vadd.f32 %v484, 2.0
        %v545 = vadd.f32 %v486, 2.0
        %v546 = vadd.f32 %v488, 2.0
        %v547 = vadd.f32 %v490, 2.0
        %v548 = vadd.f32 %v492, 2.0
        %v549 = vadd.f32 %v494, 2.0
        %v550 = vadd.f32 %v496, 2.0
        %v551 = vadd.f32 %v498, 2.0
        %v552 = vadd.f32 %v500, 2.0
        %v553 = vadd.f32 %v502, 2.0
        %v554 = vadd.f32 %v504, 2.0
        %v555 = vadd.f32 %v506, 2.0
        %v556 = vadd.f32 %v508, 2.0
        %v557 = vadd.f32 %v510, 2.0
        %v558 = vadd.f32 %v512, 2.0
        %v559 = vadd.f32 %v514, 2.0
        %v560 = vadd.f32 %v516, 2.0
        %v561 = vadd.f32 %v518, 2.0
        %v562 = vadd.f32 %v520, 2.0
        %v563 = vadd.f32 %v522, 2.0
        %v564 = vadd.f32 %v524, 2.0
        %v565 = vadd.f32 %v526, 2.0
        %v566 = vadd.f32 %v528, 2.0
        %v567 = vadd.f32 %v530, 2.0
        %v568 = vadd.f32 %v532, 2.0
        %v569 = vadd.f32 %v534, 2.0
        %v570 = vadd.f32 %v536, 2.0
        %v571 = vadd.f32 %v538, 2.0
        %v572 = vadd.f32 %v540, 2.0
        %v573 = vmul.f32 %v478, %v541
        %v574 = vmul.f32 %v480, %v542
        %v575 = vmul.f32 %v482, %v543
        %v576 = vmul.f32 %v484, %v544
        %v577 = vmul.f32 %v486, %v545
        %v578 = vmul.f32 %v488, %v546
        %v579 = vmul.f32 %v490, %v547
        %v580 = vmul.f32 %v492, %v548
        %v581 = vmul.f32 %v494, %v549
        %v582 = vmul.f32 %v496, %v550
        %v583 = vmul.f32 %v498, %v551
        %v584 = vmul.f32 %v500, %v552
        %v585 = vmul.f32 %v502, %v553
        %v586 = vmul.f32 %v504, %v554
        %v587 = vmul.f32 %v506, %v555
        %v588 = vmul.f32 %v508, %v556
        %v589 = vmul.f32 %v510, %v557
        %v590 = vmul.f32 %v512, %v558
        %v591 = vmul.f32 %v514, %v559
        %v592 = vmul.f32 %v516, %v560
        %v593 = vmul.f32 %v518, %v561
        %v594 = vmul.f32 %v520, %v562
        %v595 = vmul.f32 %v522, %v563
        %v596 = vmul.f32 %v524, %v564
        %v597 = vmul.f32 %v526, %v565
        %v598 = vmul.f32 %v528, %v566
        %v599 = vmul.f32 %v530, %v567
        %v600 = vmul.f32 %v532, %v568
        %v601 = vmul.f32 %v534, %v569
        %v602 = vmul.f32 %v536, %v570
        %v603 = vmul.f32 %v538, %v571
        %v604 = vmul.f32 %v540, %v572
        %v605 = vadd.f32 %v573, 2.0
        %v606 = vadd.f32 %v574, 2.0
        %v607 = vadd.f32 %v575, 2.0
        %v608 = vadd.f32 %v576, 2.0
        %v609 = vadd.f32 %v577, 2.0
        %v610 = vadd.f32 %v578, 2.0
        %v611 = vadd.f32 %v579, 2.0
        %v612 = vadd.f32 %v580, 2.0
        %v613 = vadd.f32 %v581, 2.0
        %v614 = vadd.f32 %v582, 2.0
        %v615 = vadd.f32 %v583, 2.0
        %v616 = vadd.f32 %v584, 2.0
        %v617 = vadd.f32 %v585, 2.0
        %v618 = vadd.f32 %v586, 2.0
        %v619 = vadd.f32 %v587, 2.0
        %v620 = vadd.f32 %v588, 2.0
        %v621 = vadd.f32 %v589, 2.0
        %v622 = vadd.f32 %v590, 2.0
        %v623 = vadd.f32 %v591, 2.0
        %v624 = vadd.f32 %v592, 2.0
        %v625 = vadd.f32 %v593, 2.0
        %v626 = vadd.f32 %v594, 2.0
        %v627 = vadd.f32 %v595, 2.0
        %v628 = vadd.f32 %v596, 2.0
        %v629 = vadd.f32 %v597, 2.0
        %v630 = vadd.f32 %v598, 2.0
        %v631 = vadd.f32 %v599, 2.0
        %v632 = vadd.f32 %v600, 2.0
        %v633 = vadd.f32 %v601, 2.0
        %v634 = vadd.f32 %v602, 2.0
        %v635 = vadd.f32 %v603, 2.0
        %v636 = vadd.f32 %v604, 2.0
        %v637 = vrcp.pop %v605
        %v638 = vrcp.pop %v606
        %v639 = vrcp.pop %v607
        %v640 = vrcp.pop %v608
        %v641 = vrcp.pop %v609
        %v642 = vrcp.pop %v610
        %v643 = vrcp.pop %v611
        %v644 = vrcp.pop %v612
        %v645 = vrcp.pop %v613
        %v646 = vrcp.pop %v614
        %v647 = vrcp.pop %v615
        %v648 = vrcp.pop %v616
        %v649 = vrcp.pop %v617
        %v650 = vrcp.pop %v618
        %v651 = vrcp.pop %v619
        %v652 = vrcp.pop %v620
        %v653 = vrcp.pop %v621
        %v654 = vrcp.pop %v622
        %v655 = vrcp.pop %v623
        %v656 = vrcp.pop %v624
        %v657 = vrcp.pop %v625
        %v658 = vrcp.pop %v626
        %v659 = vrcp.pop %v627
        %v660 = vrcp.pop %v628
        %v661 = vrcp.pop %v629
        %v662 = vrcp.pop %v630
        %v663 = vrcp.pop %v631
        %v664 = vrcp.pop %v632
        %v665 = vrcp.pop %v633
        %v666 = vrcp.pop %v634
        %v667 = vrcp.pop %v635
        %v668 = vrcp.pop %v636
        %v669 = vmul.f32 %v605, %v637
        %v670 = vmul.f32 %v606, %v638
        %v671 = vmul.f32 %v607, %v639
        %v672 = vmul.f32 %v608, %v640
        %v673 = vmul.f32 %v609, %v641
        %v674 = vmul.f32 %v610, %v642
        %v675 = vmul.f32 %v611, %v643
        %v676 = vmul.f32 %v612, %v644
        %v677 = vmul.f32 %v613, %v645
        %v678 = vmul.f32 %v614, %v646
        %v679 = vmul.f32 %v615, %v647
        %v680 = vmul.f32 %v616, %v648
        %v681 = vmul.f32 %v617, %v649
        %v682 = vmul.f32 %v618, %v650
        %v683 = vmul.f32 %v619, %v651
        %v684 = vmul.f32 %v620, %v652
        %v685 = vmul.f32 %v621, %v653
        %v686 = vmul.f32 %v622, %v654
        %v687 = vmul.f32 %v623, %v655
        %v688 = vmul.f32 %v624, %v656
        %v689 = vmul.f32 %v625, %v657
        %v690 = vmul.f32 %v626, %v658
        %v691 = vmul.f32 %v627, %v659
        %v692 = vmul.f32 %v628, %v660
        %v693 = vmul.f32 %v629, %v661
        %v694 = vmul.f32 %v630, %v662
        %v695 = vmul.f32 %v631, %v663
        %v696 = vmul.f32 %v632, %v664
        %v697 = vmul.f32 %v633, %v665
        %v698 = vmul.f32 %v634, %v666
        %v699 = vmul.f32 %v635, %v667
        %v700 = vmul.f32 %v636, %v668
        %v701 = vsub.f32 2.0, %v669
        %v702 = vsub.f32 2.0, %v670
        %v703 = vsub.f32 2.0, %v671
        %v704 = vsub.f32 2.0, %v672
        %v705 = vsub.f32 2.0, %v673
        %v706 = vsub.f32 2.0, %v674
        %v707 = vsub.f32 2.0, %v675
        %v708 = vsub.f32 2.0, %v676
        %v709 = vsub.f32 2.0, %v677
        %v710 = vsub.f32 2.0, %v678
        %v711 = vsub.f32 2.0, %v679
        %v712 = vsub.f32 2.0, %v680
        %v713 = vsub.f32 2.0, %v681
        %v714 = vsub.f32 2.0, %v682
        %v715 = vsub.f32 2.0, %v683
        %v716 = vsub.f32 2.0, %v684
        %v717 = vsub.f32 2.0, %v685
        %v718 = vsub.f32 2.0, %v686
        %v719 = vsub.f32 2.0, %v687
        %v720 = vsub.f32 2.0, %v688
        %v721 = vsub.f32 2.0, %v689
        %v722 = vsub.f32 2.0, %v690
        %v723 = vsub.f32 2.0, %v691
        %v724 = vsub.f32 2.0, %v692
        %v725 = vsub.f32 2.0, %v693
        %v726 = vsub.f32 2.0, %v694
        %v727 = vsub.f32 2.0, %v695
        %v728 = vsub.f32 2.0, %v696
        %v729 = vsub.f32 2.0, %v697
        %v730 = vsub.f32 2.0, %v698
        %v731 = vsub.f32 2.0, %v699
        %v732 = vsub.f32 2.0, %v700
        %v733 = vmul.f32 %v637, %v701
        %v734 = vmul.f32 %v638, %v702
        %v735 = vmul.f32 %v639, %v703
        %v736 = vmul.f32 %v640, %v704
        %v737 = vmul.f32 %v641, %v705
        %v738 = vmul.f32 %v642, %v706
        %v739 = vmul.f32 %v643, %v707
        %v740 = vmul.f32 %v644, %v708
        %v741 = vmul.f32 %v645, %v709
        %v742 = vmul.f32 %v646, %v710
        %v743 = vmul.f32 %v647, %v711
        %v744 = vmul.f32 %v648, %v712
        %v745 = vmul.f32 %v649, %v713
        %v746 = vmul.f32 %v650, %v714
        %v747 = vmul.f32 %v651, %v715
        %v748 = vmul.f32 %v652, %v716
        %v749 = vmul.f32 %v653, %v717
        %v750 = vmul.f32 %v654, %v718
        %v751 = vmul.f32 %v655, %v719
        %v752 = vmul.f32 %v656, %v720
        %v753 = vmul.f32 %v657, %v721
        %v754 = vmul.f32 %v658, %v722
        %v755 = vmul.f32 %v659, %v723
        %v756 = vmul.f32 %v660, %v724
        %v757 = vmul.f32 %v661, %v725
        %v758 = vmul.f32 %v662, %v726
        %v759 = vmul.f32 %v663, %v727
        %v760 = vmul.f32 %v664, %v728
        %v761 = vmul.f32 %v665, %v729
        %v762 = vmul.f32 %v666, %v730
        %v763 = vmul.f32 %v667, %v731
        %v764 = vmul.f32 %v668, %v732
        %v765 = vmul.f32 %v350, %v573
        %v766 = vmul.f32 %v353, %v574
        %v767 = vmul.f32 %v356, %v575
        %v768 = vmul.f32 %v359, %v576
        %v769 = vmul.f32 %v362, %v577
        %v770 = vmul.f32 %v365, %v578
        %v771 = vmul.f32 %v368, %v579
        %v772 = vmul.f32 %v371, %v580
        %v773 = vmul.f32 %v374, %v581
        %v774 = vmul.f32 %v377, %v582
        %v775 = vmul.f32 %v380, %v583
        %v776 = vmul.f32 %v383, %v584
        %v777 = vmul.f32 %v386, %v585
        %v778 = vmul.f32 %v389, %v586
        %v779 = vmul.f32 %v392, %v587
        %v780 = vmul.f32 %v395, %v588
        %v781 = vmul.f32 %v398, %v589
        %v782 = vmul.f32 %v401, %v590
        %v783 = vmul.f32 %v404, %v591
        %v784 = vmul.f32 %v407, %v592
        %v785 = vmul.f32 %v410, %v593
        %v786 = vmul.f32 %v413, %v594
        %v787 = vmul.f32 %v416, %v595
        %v788 = vmul.f32 %v419, %v596
        %v789 = vmul.f32 %v422, %v597
        %v790 = vmul.f32 %v425, %v598
        %v791 = vmul.f32 %v428, %v599
        %v792 = vmul.f32 %v431, %v600
        %v793 = vmul.f32 %v434, %v601
        %v794 = vmul.f32 %v437, %v602
        %v795 = vmul.f32 %v440, %v603
        %v796 = vmul.f32 %v443, %v604
        %v797 = vmul.f32 %v765, %v733
        %v798 = vmul.f32 %v766, %v734
        %v799 = vmul.f32 %v767, %v735
        %v800 = vmul.f32 %v768, %v736
        %v801 = vmul.f32 %v769, %v737
        %v802 = vmul.f32 %v770, %v738
        %v803 = vmul.f32 %v771, %v739
        %v804 = vmul.f32 %v772, %v740
        %v805 = vmul.f32 %v773, %v741
        %v806 = vmul.f32 %v774, %v742
        %v807 = vmul.f32 %v775, %v743
        %v808 = vmul.f32 %v776, %v744
        %v809 = vmul.f32 %v777, %v745
        %v810 = vmul.f32 %v778, %v746
        %v811 = vmul.f32 %v779, %v747
        %v812 = vmul.f32 %v780, %v748
        %v813 = vmul.f32 %v781, %v749
        %v814 = vmul.f32 %v782, %v750
        %v815 = vmul.f32 %v783, %v751
        %v816 = vmul.f32 %v784, %v752
        %v817 = vmul.f32 %v785, %v753
        %v818 = vmul.f32 %v786, %v754
        %v819 = vmul.f32 %v787, %v755
        %v820 = vmul.f32 %v788, %v756
        %v821 = vmul.f32 %v789, %v757
        %v822 = vmul.f32 %v790, %v758
        %v823 = vmul.f32 %v791, %v759
        %v824 = vmul.f32 %v792, %v760
        %v825 = vmul.f32 %v793, %v761
        %v826 = vmul.f32 %v794, %v762
        %v827 = vmul.f32 %v795, %v763
        %v828 = vmul.f32 %v796, %v764
        %v829 = vld [vmem:[#allocation7] sm:$0xff]
        %v830 = vld [vmem:[#allocation7 + $0x8] sm:$0xff]
        %v831 = vld [vmem:[#allocation7 + $0x10] sm:$0xff]
        %v832 = vld [vmem:[#allocation7 + $0x18] sm:$0xff]
        %v833 = vld [vmem:[#allocation7 + $0x20] sm:$0xff]
        %v834 = vld [vmem:[#allocation7 + $0x28] sm:$0xff]
        %v835 = vld [vmem:[#allocation7 + $0x30] sm:$0xff]
        %v836 = vld [vmem:[#allocation7 + $0x38] sm:$0xff]
        %v837 = vld [vmem:[#allocation7 + $0x40] sm:$0xff]
        %v838 = vld [vmem:[#allocation7 + $0x48] sm:$0xff]
        %v839 = vld [vmem:[#allocation7 + $0x50] sm:$0xff]
        %v840 = vld [vmem:[#allocation7 + $0x58] sm:$0xff]
        %v841 = vld [vmem:[#allocation7 + $0x60] sm:$0xff]
        %v842 = vld [vmem:[#allocation7 + $0x68] sm:$0xff]
        %v843 = vld [vmem:[#allocation7 + $0x70] sm:$0xff]
        %v844 = vld [vmem:[#allocation7 + $0x78] sm:$0xff]
        %v845 = vld [vmem:[%s4] sm:$0x1]
        %v847 = vperm.slane %v845, 0
        %849 = vmatpush.msra.mxu0 %v844
        %850 = vmatpush.msra.mxu0 %v843
        %851 = vmatpush.msra.mxu0 %v842
        %852 = vmatpush.msra.mxu0 %v841
        %853 = vmatpush.msra.mxu0 %v840
        %854 = vmatpush.msra.mxu0 %v839
        %855 = vmatpush.msra.mxu0 %v838
        %856 = vmatpush.msra.mxu0 %v837
        %857 = vmatpush.msra.mxu0 %v836
        %858 = vmatpush.msra.mxu0 %v835
        %859 = vmatpush.msra.mxu0 %v834
        %860 = vmatpush.msra.mxu0 %v833
        %861 = vmatpush.msra.mxu0 %v832
        %862 = vmatpush.msra.mxu0 %v831
        %863 = vmatpush.msra.mxu0 %v830
        %864 = vmatpush.msra.mxu0 %v829
        %865 = vmatmul.f32.gmra.mxu0 %v797
        %v866 = vpop.f32.mrf.mxu0
        %v867 = vadd.f32 %v847, %v866
        %868 = vmatmul.f32.gmra.mxu0 %v798
        %v869 = vpop.f32.mrf.mxu0
        %v870 = vadd.f32 %v847, %v869
        %871 = vmatmul.f32.gmra.mxu0 %v799
        %v872 = vpop.f32.mrf.mxu0
        %v873 = vadd.f32 %v847, %v872
        %874 = vmatmul.f32.gmra.mxu0 %v800
        %v875 = vpop.f32.mrf.mxu0
        %v876 = vadd.f32 %v847, %v875
        %877 = vmatmul.f32.gmra.mxu0 %v801
        %v878 = vpop.f32.mrf.mxu0
        %v879 = vadd.f32 %v847, %v878
        %880 = vmatmul.f32.gmra.mxu0 %v802
        %v881 = vpop.f32.mrf.mxu0
        %v882 = vadd.f32 %v847, %v881
        %883 = vmatmul.f32.gmra.mxu0 %v803
        %v884 = vpop.f32.mrf.mxu0
        %v885 = vadd.f32 %v847, %v884
        %886 = vmatmul.f32.gmra.mxu0 %v804
        %v887 = vpop.f32.mrf.mxu0
        %v888 = vadd.f32 %v847, %v887
        %889 = vmatmul.f32.gmra.mxu0 %v805
        %v890 = vpop.f32.mrf.mxu0
        %v891 = vadd.f32 %v847, %v890
        %892 = vmatmul.f32.gmra.mxu0 %v806
        %v893 = vpop.f32.mrf.mxu0
        %v894 = vadd.f32 %v847, %v893
        %895 = vmatmul.f32.gmra.mxu0 %v807
        %v896 = vpop.f32.mrf.mxu0
        %v897 = vadd.f32 %v847, %v896
        %898 = vmatmul.f32.gmra.mxu0 %v808
        %v899 = vpop.f32.mrf.mxu0
        %v900 = vadd.f32 %v847, %v899
        %901 = vmatmul.f32.gmra.mxu0 %v809
        %v902 = vpop.f32.mrf.mxu0
        %v903 = vadd.f32 %v847, %v902
        %904 = vmatmul.f32.gmra.mxu0 %v810
        %v905 = vpop.f32.mrf.mxu0
        %v906 = vadd.f32 %v847, %v905
        %907 = vmatmul.f32.gmra.mxu0 %v811
        %v908 = vpop.f32.mrf.mxu0
        %v909 = vadd.f32 %v847, %v908
        %910 = vmatmul.f32.gmra.mxu0 %v812
        %v911 = vpop.f32.mrf.mxu0
        %v912 = vadd.f32 %v847, %v911
        %913 = vmatmul.f32.gmra.mxu0 %v813
        %v914 = vpop.f32.mrf.mxu0
        %v915 = vadd.f32 %v847, %v914
        %916 = vmatmul.f32.gmra.mxu0 %v814
        %v917 = vpop.f32.mrf.mxu0
        %v918 = vadd.f32 %v847, %v917
        %919 = vmatmul.f32.gmra.mxu0 %v815
        %v920 = vpop.f32.mrf.mxu0
        %v921 = vadd.f32 %v847, %v920
        %922 = vmatmul.f32.gmra.mxu0 %v816
        %v923 = vpop.f32.mrf.mxu0
        %v924 = vadd.f32 %v847, %v923
        %925 = vmatmul.f32.gmra.mxu0 %v817
        %v926 = vpop.f32.mrf.mxu0
        %v927 = vadd.f32 %v847, %v926
        %928 = vmatmul.f32.gmra.mxu0 %v818
        %v929 = vpop.f32.mrf.mxu0
        %v930 = vadd.f32 %v847, %v929
        %931 = vmatmul.f32.gmra.mxu0 %v819
        %v932 = vpop.f32.mrf.mxu0
        %v933 = vadd.f32 %v847, %v932
        %934 = vmatmul.f32.gmra.mxu0 %v820
        %v935 = vpop.f32.mrf.mxu0
        %v936 = vadd.f32 %v847, %v935
        %937 = vmatmul.f32.gmra.mxu0 %v821
        %v938 = vpop.f32.mrf.mxu0
        %v939 = vadd.f32 %v847, %v938
        %940 = vmatmul.f32.gmra.mxu0 %v822
        %v941 = vpop.f32.mrf.mxu0
        %v942 = vadd.f32 %v847, %v941
        %943 = vmatmul.f32.gmra.mxu0 %v823
        %v944 = vpop.f32.mrf.mxu0
        %v945 = vadd.f32 %v847, %v944
        %946 = vmatmul.f32.gmra.mxu0 %v824
        %v947 = vpop.f32.mrf.mxu0
        %v948 = vadd.f32 %v847, %v947
        %949 = vmatmul.f32.gmra.mxu0 %v825
        %v950 = vpop.f32.mrf.mxu0
        %v951 = vadd.f32 %v847, %v950
        %952 = vmatmul.f32.gmra.mxu0 %v826
        %v953 = vpop.f32.mrf.mxu0
        %v954 = vadd.f32 %v847, %v953
        %955 = vmatmul.f32.gmra.mxu0 %v827
        %v956 = vpop.f32.mrf.mxu0
        %v957 = vadd.f32 %v847, %v956
        %958 = vmatmul.f32.gmra.mxu0 %v828
        %v959 = vpop.f32.mrf.mxu0
        %v960 = vadd.f32 %v847, %v959
        %961 = vdwg.mxu0
        %v962 = vmin.f32 %v867, 20.0
        %v963 = vmin.f32 %v870, 20.0
        %v964 = vmin.f32 %v873, 20.0
        %v965 = vmin.f32 %v876, 20.0
        %v966 = vmin.f32 %v879, 20.0
        %v967 = vmin.f32 %v882, 20.0
        %v968 = vmin.f32 %v885, 20.0
        %v969 = vmin.f32 %v888, 20.0
        %v970 = vmin.f32 %v891, 20.0
        %v971 = vmin.f32 %v894, 20.0
        %v972 = vmin.f32 %v897, 20.0
        %v973 = vmin.f32 %v900, 20.0
        %v974 = vmin.f32 %v903, 20.0
        %v975 = vmin.f32 %v906, 20.0
        %v976 = vmin.f32 %v909, 20.0
        %v977 = vmin.f32 %v912, 20.0
        %v978 = vmin.f32 %v915, 20.0
        %v979 = vmin.f32 %v918, 20.0
        %v980 = vmin.f32 %v921, 20.0
        %v981 = vmin.f32 %v924, 20.0
        %v982 = vmin.f32 %v927, 20.0
        %v983 = vmin.f32 %v930, 20.0
        %v984 = vmin.f32 %v933, 20.0
        %v985 = vmin.f32 %v936, 20.0
        %v986 = vmin.f32 %v939, 20.0
        %v987 = vmin.f32 %v942, 20.0
        %v988 = vmin.f32 %v945, 20.0
        %v989 = vmin.f32 %v948, 20.0
        %v990 = vmin.f32 %v951, 20.0
        %v991 = vmin.f32 %v954, 20.0
        %v992 = vmin.f32 %v957, 20.0
        %v993 = vmin.f32 %v960, 20.0
        %v994 = vmul.f32 %v962, 1.442695
        %v995 = vpow.pop %v994
        %v996 = vmul.f32 %v963, 1.442695
        %v997 = vpow.pop %v996
        %v998 = vmul.f32 %v964, 1.442695
        %v999 = vpow.pop %v998
        %v1000 = vmul.f32 %v965, 1.442695
        %v1001 = vpow.pop %v1000
        %v1002 = vmul.f32 %v966, 1.442695
        %v1003 = vpow.pop %v1002
        %v1004 = vmul.f32 %v967, 1.442695
        %v1005 = vpow.pop %v1004
        %v1006 = vmul.f32 %v968, 1.442695
        %v1007 = vpow.pop %v1006
        %v1008 = vmul.f32 %v969, 1.442695
        %v1009 = vpow.pop %v1008
        %v1010 = vmul.f32 %v970, 1.442695
        %v1011 = vpow.pop %v1010
        %v1012 = vmul.f32 %v971, 1.442695
        %v1013 = vpow.pop %v1012
        %v1014 = vmul.f32 %v972, 1.442695
        %v1015 = vpow.pop %v1014
        %v1016 = vmul.f32 %v973, 1.442695
        %v1017 = vpow.pop %v1016
        %v1018 = vmul.f32 %v974, 1.442695
        %v1019 = vpow.pop %v1018
        %v1020 = vmul.f32 %v975, 1.442695
        %v1021 = vpow.pop %v1020
        %v1022 = vmul.f32 %v976, 1.442695
        %v1023 = vpow.pop %v1022
        %v1024 = vmul.f32 %v977, 1.442695
        %v1025 = vpow.pop %v1024
        %v1026 = vmul.f32 %v978, 1.442695
        %v1027 = vpow.pop %v1026
        %v1028 = vmul.f32 %v979, 1.442695
        %v1029 = vpow.pop %v1028
        %v1030 = vmul.f32 %v980, 1.442695
        %v1031 = vpow.pop %v1030
        %v1032 = vmul.f32 %v981, 1.442695
        %v1033 = vpow.pop %v1032
        %v1034 = vmul.f32 %v982, 1.442695
        %v1035 = vpow.pop %v1034
        %v1036 = vmul.f32 %v983, 1.442695
        %v1037 = vpow.pop %v1036
        %v1038 = vmul.f32 %v984, 1.442695
        %v1039 = vpow.pop %v1038
        %v1040 = vmul.f32 %v985, 1.442695
        %v1041 = vpow.pop %v1040
        %v1042 = vmul.f32 %v986, 1.442695
        %v1043 = vpow.pop %v1042
        %v1044 = vmul.f32 %v987, 1.442695
        %v1045 = vpow.pop %v1044
        %v1046 = vmul.f32 %v988, 1.442695
        %v1047 = vpow.pop %v1046
        %v1048 = vmul.f32 %v989, 1.442695
        %v1049 = vpow.pop %v1048
        %v1050 = vmul.f32 %v990, 1.442695
        %v1051 = vpow.pop %v1050
        %v1052 = vmul.f32 %v991, 1.442695
        %v1053 = vpow.pop %v1052
        %v1054 = vmul.f32 %v992, 1.442695
        %v1055 = vpow.pop %v1054
        %v1056 = vmul.f32 %v993, 1.442695
        %v1057 = vpow.pop %v1056
        %v1058 = vadd.f32 %v995, 2.0
        %v1059 = vadd.f32 %v997, 2.0
        %v1060 = vadd.f32 %v999, 2.0
        %v1061 = vadd.f32 %v1001, 2.0
        %v1062 = vadd.f32 %v1003, 2.0
        %v1063 = vadd.f32 %v1005, 2.0
        %v1064 = vadd.f32 %v1007, 2.0
        %v1065 = vadd.f32 %v1009, 2.0
        %v1066 = vadd.f32 %v1011, 2.0
        %v1067 = vadd.f32 %v1013, 2.0
        %v1068 = vadd.f32 %v1015, 2.0
        %v1069 = vadd.f32 %v1017, 2.0
        %v1070 = vadd.f32 %v1019, 2.0
        %v1071 = vadd.f32 %v1021, 2.0
        %v1072 = vadd.f32 %v1023, 2.0
        %v1073 = vadd.f32 %v1025, 2.0
        %v1074 = vadd.f32 %v1027, 2.0
        %v1075 = vadd.f32 %v1029, 2.0
        %v1076 = vadd.f32 %v1031, 2.0
        %v1077 = vadd.f32 %v1033, 2.0
        %v1078 = vadd.f32 %v1035, 2.0
        %v1079 = vadd.f32 %v1037, 2.0
        %v1080 = vadd.f32 %v1039, 2.0
        %v1081 = vadd.f32 %v1041, 2.0
        %v1082 = vadd.f32 %v1043, 2.0
        %v1083 = vadd.f32 %v1045, 2.0
        %v1084 = vadd.f32 %v1047, 2.0
        %v1085 = vadd.f32 %v1049, 2.0
        %v1086 = vadd.f32 %v1051, 2.0
        %v1087 = vadd.f32 %v1053, 2.0
        %v1088 = vadd.f32 %v1055, 2.0
        %v1089 = vadd.f32 %v1057, 2.0
        %v1090 = vmul.f32 %v995, %v1058
        %v1091 = vmul.f32 %v997, %v1059
        %v1092 = vmul.f32 %v999, %v1060
        %v1093 = vmul.f32 %v1001, %v1061
        %v1094 = vmul.f32 %v1003, %v1062
        %v1095 = vmul.f32 %v1005, %v1063
        %v1096 = vmul.f32 %v1007, %v1064
        %v1097 = vmul.f32 %v1009, %v1065
        %v1098 = vmul.f32 %v1011, %v1066
        %v1099 = vmul.f32 %v1013, %v1067
        %v1100 = vmul.f32 %v1015, %v1068
        %v1101 = vmul.f32 %v1017, %v1069
        %v1102 = vmul.f32 %v1019, %v1070
        %v1103 = vmul.f32 %v1021, %v1071
        %v1104 = vmul.f32 %v1023, %v1072
        %v1105 = vmul.f32 %v1025, %v1073
        %v1106 = vmul.f32 %v1027, %v1074
        %v1107 = vmul.f32 %v1029, %v1075
        %v1108 = vmul.f32 %v1031, %v1076
        %v1109 = vmul.f32 %v1033, %v1077
        %v1110 = vmul.f32 %v1035, %v1078
        %v1111 = vmul.f32 %v1037, %v1079
        %v1112 = vmul.f32 %v1039, %v1080
        %v1113 = vmul.f32 %v1041, %v1081
        %v1114 = vmul.f32 %v1043, %v1082
        %v1115 = vmul.f32 %v1045, %v1083
        %v1116 = vmul.f32 %v1047, %v1084
        %v1117 = vmul.f32 %v1049, %v1085
        %v1118 = vmul.f32 %v1051, %v1086
        %v1119 = vmul.f32 %v1053, %v1087
        %v1120 = vmul.f32 %v1055, %v1088
        %v1121 = vmul.f32 %v1057, %v1089
        %v1122 = vadd.f32 %v1090, 2.0
        %v1123 = vadd.f32 %v1091, 2.0
        %v1124 = vadd.f32 %v1092, 2.0
        %v1125 = vadd.f32 %v1093, 2.0
        %v1126 = vadd.f32 %v1094, 2.0
        %v1127 = vadd.f32 %v1095, 2.0
        %v1128 = vadd.f32 %v1096, 2.0
        %v1129 = vadd.f32 %v1097, 2.0
        %v1130 = vadd.f32 %v1098, 2.0
        %v1131 = vadd.f32 %v1099, 2.0
        %v1132 = vadd.f32 %v1100, 2.0
        %v1133 = vadd.f32 %v1101, 2.0
        %v1134 = vadd.f32 %v1102, 2.0
        %v1135 = vadd.f32 %v1103, 2.0
        %v1136 = vadd.f32 %v1104, 2.0
        %v1137 = vadd.f32 %v1105, 2.0
        %v1138 = vadd.f32 %v1106, 2.0
        %v1139 = vadd.f32 %v1107, 2.0
        %v1140 = vadd.f32 %v1108, 2.0
        %v1141 = vadd.f32 %v1109, 2.0
        %v1142 = vadd.f32 %v1110, 2.0
        %v1143 = vadd.f32 %v1111, 2.0
        %v1144 = vadd.f32 %v1112, 2.0
        %v1145 = vadd.f32 %v1113, 2.0
        %v1146 = vadd.f32 %v1114, 2.0
        %v1147 = vadd.f32 %v1115, 2.0
        %v1148 = vadd.f32 %v1116, 2.0
        %v1149 = vadd.f32 %v1117, 2.0
        %v1150 = vadd.f32 %v1118, 2.0
        %v1151 = vadd.f32 %v1119, 2.0
        %v1152 = vadd.f32 %v1120, 2.0
        %v1153 = vadd.f32 %v1121, 2.0
        %v1154 = vrcp.pop %v1122
        %v1155 = vrcp.pop %v1123
        %v1156 = vrcp.pop %v1124
        %v1157 = vrcp.pop %v1125
        %v1158 = vrcp.pop %v1126
        %v1159 = vrcp.pop %v1127
        %v1160 = vrcp.pop %v1128
        %v1161 = vrcp.pop %v1129
        %v1162 = vrcp.pop %v1130
        %v1163 = vrcp.pop %v1131
        %v1164 = vrcp.pop %v1132
        %v1165 = vrcp.pop %v1133
        %v1166 = vrcp.pop %v1134
        %v1167 = vrcp.pop %v1135
        %v1168 = vrcp.pop %v1136
        %v1169 = vrcp.pop %v1137
        %v1170 = vrcp.pop %v1138
        %v1171 = vrcp.pop %v1139
        %v1172 = vrcp.pop %v1140
        %v1173 = vrcp.pop %v1141
        %v1174 = vrcp.pop %v1142
        %v1175 = vrcp.pop %v1143
        %v1176 = vrcp.pop %v1144
        %v1177 = vrcp.pop %v1145
        %v1178 = vrcp.pop %v1146
        %v1179 = vrcp.pop %v1147
        %v1180 = vrcp.pop %v1148
        %v1181 = vrcp.pop %v1149
        %v1182 = vrcp.pop %v1150
        %v1183 = vrcp.pop %v1151
        %v1184 = vrcp.pop %v1152
        %v1185 = vrcp.pop %v1153
        %v1186 = vmul.f32 %v1122, %v1154
        %v1187 = vmul.f32 %v1123, %v1155
        %v1188 = vmul.f32 %v1124, %v1156
        %v1189 = vmul.f32 %v1125, %v1157
        %v1190 = vmul.f32 %v1126, %v1158
        %v1191 = vmul.f32 %v1127, %v1159
        %v1192 = vmul.f32 %v1128, %v1160
        %v1193 = vmul.f32 %v1129, %v1161
        %v1194 = vmul.f32 %v1130, %v1162
        %v1195 = vmul.f32 %v1131, %v1163
        %v1196 = vmul.f32 %v1132, %v1164
        %v1197 = vmul.f32 %v1133, %v1165
        %v1198 = vmul.f32 %v1134, %v1166
        %v1199 = vmul.f32 %v1135, %v1167
        %v1200 = vmul.f32 %v1136, %v1168
        %v1201 = vmul.f32 %v1137, %v1169
        %v1202 = vmul.f32 %v1138, %v1170
        %v1203 = vmul.f32 %v1139, %v1171
        %v1204 = vmul.f32 %v1140, %v1172
        %v1205 = vmul.f32 %v1141, %v1173
        %v1206 = vmul.f32 %v1142, %v1174
        %v1207 = vmul.f32 %v1143, %v1175
        %v1208 = vmul.f32 %v1144, %v1176
        %v1209 = vmul.f32 %v1145, %v1177
        %v1210 = vmul.f32 %v1146, %v1178
        %v1211 = vmul.f32 %v1147, %v1179
        %v1212 = vmul.f32 %v1148, %v1180
        %v1213 = vmul.f32 %v1149, %v1181
        %v1214 = vmul.f32 %v1150, %v1182
        %v1215 = vmul.f32 %v1151, %v1183
        %v1216 = vmul.f32 %v1152, %v1184
        %v1217 = vmul.f32 %v1153, %v1185
        %v1218 = vsub.f32 2.0, %v1186
        %v1219 = vsub.f32 2.0, %v1187
        %v1220 = vsub.f32 2.0, %v1188
        %v1221 = vsub.f32 2.0, %v1189
        %v1222 = vsub.f32 2.0, %v1190
        %v1223 = vsub.f32 2.0, %v1191
        %v1224 = vsub.f32 2.0, %v1192
        %v1225 = vsub.f32 2.0, %v1193
        %v1226 = vsub.f32 2.0, %v1194
        %v1227 = vsub.f32 2.0, %v1195
        %v1228 = vsub.f32 2.0, %v1196
        %v1229 = vsub.f32 2.0, %v1197
        %v1230 = vsub.f32 2.0, %v1198
        %v1231 = vsub.f32 2.0, %v1199
        %v1232 = vsub.f32 2.0, %v1200
        %v1233 = vsub.f32 2.0, %v1201
        %v1234 = vsub.f32 2.0, %v1202
        %v1235 = vsub.f32 2.0, %v1203
        %v1236 = vsub.f32 2.0, %v1204
        %v1237 = vsub.f32 2.0, %v1205
        %v1238 = vsub.f32 2.0, %v1206
        %v1239 = vsub.f32 2.0, %v1207
        %v1240 = vsub.f32 2.0, %v1208
        %v1241 = vsub.f32 2.0, %v1209
        %v1242 = vsub.f32 2.0, %v1210
        %v1243 = vsub.f32 2.0, %v1211
        %v1244 = vsub.f32 2.0, %v1212
        %v1245 = vsub.f32 2.0, %v1213
        %v1246 = vsub.f32 2.0, %v1214
        %v1247 = vsub.f32 2.0, %v1215
        %v1248 = vsub.f32 2.0, %v1216
        %v1249 = vsub.f32 2.0, %v1217
        %v1250 = vmul.f32 %v1154, %v1218
        %v1251 = vmul.f32 %v1155, %v1219
        %v1252 = vmul.f32 %v1156, %v1220
        %v1253 = vmul.f32 %v1157, %v1221
        %v1254 = vmul.f32 %v1158, %v1222
        %v1255 = vmul.f32 %v1159, %v1223
        %v1256 = vmul.f32 %v1160, %v1224
        %v1257 = vmul.f32 %v1161, %v1225
        %v1258 = vmul.f32 %v1162, %v1226
        %v1259 = vmul.f32 %v1163, %v1227
        %v1260 = vmul.f32 %v1164, %v1228
        %v1261 = vmul.f32 %v1165, %v1229
        %v1262 = vmul.f32 %v1166, %v1230
        %v1263 = vmul.f32 %v1167, %v1231
        %v1264 = vmul.f32 %v1168, %v1232
        %v1265 = vmul.f32 %v1169, %v1233
        %v1266 = vmul.f32 %v1170, %v1234
        %v1267 = vmul.f32 %v1171, %v1235
        %v1268 = vmul.f32 %v1172, %v1236
        %v1269 = vmul.f32 %v1173, %v1237
        %v1270 = vmul.f32 %v1174, %v1238
        %v1271 = vmul.f32 %v1175, %v1239
        %v1272 = vmul.f32 %v1176, %v1240
        %v1273 = vmul.f32 %v1177, %v1241
        %v1274 = vmul.f32 %v1178, %v1242
        %v1275 = vmul.f32 %v1179, %v1243
        %v1276 = vmul.f32 %v1180, %v1244
        %v1277 = vmul.f32 %v1181, %v1245
        %v1278 = vmul.f32 %v1182, %v1246
        %v1279 = vmul.f32 %v1183, %v1247
        %v1280 = vmul.f32 %v1184, %v1248
        %v1281 = vmul.f32 %v1185, %v1249
        %v1282 = vmul.f32 %v867, %v1090
        %v1283 = vmul.f32 %v870, %v1091
        %v1284 = vmul.f32 %v873, %v1092
        %v1285 = vmul.f32 %v876, %v1093
        %v1286 = vmul.f32 %v879, %v1094
        %v1287 = vmul.f32 %v882, %v1095
        %v1288 = vmul.f32 %v885, %v1096
        %v1289 = vmul.f32 %v888, %v1097
        %v1290 = vmul.f32 %v891, %v1098
        %v1291 = vmul.f32 %v894, %v1099
        %v1292 = vmul.f32 %v897, %v1100
        %v1293 = vmul.f32 %v900, %v1101
        %v1294 = vmul.f32 %v903, %v1102
        %v1295 = vmul.f32 %v906, %v1103
        %v1296 = vmul.f32 %v909, %v1104
        %v1297 = vmul.f32 %v912, %v1105
        %v1298 = vmul.f32 %v915, %v1106
        %v1299 = vmul.f32 %v918, %v1107
        %v1300 = vmul.f32 %v921, %v1108
        %v1301 = vmul.f32 %v924, %v1109
        %v1302 = vmul.f32 %v927, %v1110
        %v1303 = vmul.f32 %v930, %v1111
        %v1304 = vmul.f32 %v933, %v1112
        %v1305 = vmul.f32 %v936, %v1113
        %v1306 = vmul.f32 %v939, %v1114
        %v1307 = vmul.f32 %v942, %v1115
        %v1308 = vmul.f32 %v945, %v1116
        %v1309 = vmul.f32 %v948, %v1117
        %v1310 = vmul.f32 %v951, %v1118
        %v1311 = vmul.f32 %v954, %v1119
        %v1312 = vmul.f32 %v957, %v1120
        %v1313 = vmul.f32 %v960, %v1121
        %v1314 = vmul.f32 %v1282, %v1250
        %v1315 = vmul.f32 %v1283, %v1251
        %v1316 = vmul.f32 %v1284, %v1252
        %v1317 = vmul.f32 %v1285, %v1253
        %v1318 = vmul.f32 %v1286, %v1254
        %v1319 = vmul.f32 %v1287, %v1255
        %v1320 = vmul.f32 %v1288, %v1256
        %v1321 = vmul.f32 %v1289, %v1257
        %v1322 = vmul.f32 %v1290, %v1258
        %v1323 = vmul.f32 %v1291, %v1259
        %v1324 = vmul.f32 %v1292, %v1260
        %v1325 = vmul.f32 %v1293, %v1261
        %v1326 = vmul.f32 %v1294, %v1262
        %v1327 = vmul.f32 %v1295, %v1263
        %v1328 = vmul.f32 %v1296, %v1264
        %v1329 = vmul.f32 %v1297, %v1265
        %v1330 = vmul.f32 %v1298, %v1266
        %v1331 = vmul.f32 %v1299, %v1267
        %v1332 = vmul.f32 %v1300, %v1268
        %v1333 = vmul.f32 %v1301, %v1269
        %v1334 = vmul.f32 %v1302, %v1270
        %v1335 = vmul.f32 %v1303, %v1271
        %v1336 = vmul.f32 %v1304, %v1272
        %v1337 = vmul.f32 %v1305, %v1273
        %v1338 = vmul.f32 %v1306, %v1274
        %v1339 = vmul.f32 %v1307, %v1275
        %v1340 = vmul.f32 %v1308, %v1276
        %v1341 = vmul.f32 %v1309, %v1277
        %v1342 = vmul.f32 %v1310, %v1278
        %v1343 = vmul.f32 %v1311, %v1279
        %v1344 = vmul.f32 %v1312, %v1280
        %v1345 = vmul.f32 %v1313, %v1281
        %v1346 = vadd.f32 %v1314, %v280
        %v1347 = vadd.f32 %v1315, %v281
        %v1348 = vadd.f32 %v1316, %v282
        %v1349 = vadd.f32 %v1317, %v283
        %v1350 = vadd.f32 %v1318, %v284
        %v1351 = vadd.f32 %v1319, %v285
        %v1352 = vadd.f32 %v1320, %v286
        %v1353 = vadd.f32 %v1321, %v287
        %v1354 = vadd.f32 %v1322, %v288
        %v1355 = vadd.f32 %v1323, %v289
        %v1356 = vadd.f32 %v1324, %v290
        %v1357 = vadd.f32 %v1325, %v291
        %v1358 = vadd.f32 %v1326, %v292
        %v1359 = vadd.f32 %v1327, %v293
        %v1360 = vadd.f32 %v1328, %v294
        %v1361 = vadd.f32 %v1329, %v295
        %v1362 = vadd.f32 %v1330, %v296
        %v1363 = vadd.f32 %v1331, %v297
        %v1364 = vadd.f32 %v1332, %v298
        %v1365 = vadd.f32 %v1333, %v299
        %v1366 = vadd.f32 %v1334, %v300
        %v1367 = vadd.f32 %v1335, %v301
        %v1368 = vadd.f32 %v1336, %v302
        %v1369 = vadd.f32 %v1337, %v303
        %v1370 = vadd.f32 %v1338, %v304
        %v1371 = vadd.f32 %v1339, %v305
        %v1372 = vadd.f32 %v1340, %v306
        %v1373 = vadd.f32 %v1341, %v307
        %v1374 = vadd.f32 %v1342, %v308
        %v1375 = vadd.f32 %v1343, %v309
        %v1376 = vadd.f32 %v1344, %v310
        %v1377 = vadd.f32 %v1345, %v311
        %1378 = vst [vmem:[%s277] sm:$0xff] %v1346
        %1379 = vst [vmem:[%s277 + $0x8] sm:$0xff] %v1347
        %1380 = vst [vmem:[%s277 + $0x10] sm:$0xff] %v1348
        %1381 = vst [vmem:[%s277 + $0x18] sm:$0xff] %v1349
        %1382 = vst [vmem:[%s277 + $0x20] sm:$0xff] %v1350
        %1383 = vst [vmem:[%s277 + $0x28] sm:$0xff] %v1351
        %1384 = vst [vmem:[%s277 + $0x30] sm:$0xff] %v1352
        %1385 = vst [vmem:[%s277 + $0x38] sm:$0xff] %v1353
        %1386 = vst [vmem:[%s277 + $0x40] sm:$0xff] %v1354
        %1387 = vst [vmem:[%s277 + $0x48] sm:$0xff] %v1355
        %1388 = vst [vmem:[%s277 + $0x50] sm:$0xff] %v1356
        %1389 = vst [vmem:[%s277 + $0x58] sm:$0xff] %v1357
        %1390 = vst [vmem:[%s277 + $0x60] sm:$0xff] %v1358
        %1391 = vst [vmem:[%s277 + $0x68] sm:$0xff] %v1359
        %1392 = vst [vmem:[%s277 + $0x70] sm:$0xff] %v1360
        %1393 = vst [vmem:[%s277 + $0x78] sm:$0xff] %v1361
        %1394 = vst [vmem:[%s277 + $0x80] sm:$0xff] %v1362
        %1395 = vst [vmem:[%s277 + $0x88] sm:$0xff] %v1363
        %1396 = vst [vmem:[%s277 + $0x90] sm:$0xff] %v1364
        %1397 = vst [vmem:[%s277 + $0x98] sm:$0xff] %v1365
        %1398 = vst [vmem:[%s277 + $0xa0] sm:$0xff] %v1366
        %1399 = vst [vmem:[%s277 + $0xa8] sm:$0xff] %v1367
        %1400 = vst [vmem:[%s277 + $0xb0] sm:$0xff] %v1368
        %1401 = vst [vmem:[%s277 + $0xb8] sm:$0xff] %v1369
        %1402 = vst [vmem:[%s277 + $0xc0] sm:$0xff] %v1370
        %1403 = vst [vmem:[%s277 + $0xc8] sm:$0xff] %v1371
        %1404 = vst [vmem:[%s277 + $0xd0] sm:$0xff] %v1372
        %1405 = vst [vmem:[%s277 + $0xd8] sm:$0xff] %v1373
        %1406 = vst [vmem:[%s277 + $0xe0] sm:$0xff] %v1374
        %1407 = vst [vmem:[%s277 + $0xe8] sm:$0xff] %v1375
        %1408 = vst [vmem:[%s277 + $0xf0] sm:$0xff] %v1376
        %1409 = vst [vmem:[%s277 + $0xf8] sm:$0xff] %v1377
        %s1410 = sand.u32 %s141, 1
        %s1411 = scalar_lea.sflag [#allocation4], %s1410
        %s1412 = sand.u32 %s141, 1
        %s1413 = smul.addr %s1412, 256
        %s1414 = scalar_lea.vmem [#allocation8], %s1413
        // Predicated region
        $region53: #{tpu_custom_call.1} parent=39 // pred_check
          %p1415 = pneg %p151
        $region54: #{tpu_custom_call.1} parent=39 // pred_check_branch
          %1417 = sbr.rel (%p1415) target = $region56
        $region55: #{tpu_custom_call.1} parent=39 // pred_region
          %s1418 = smul.u32 32, %s23
          %1420 = vsyncadd %s1411, 0
          %s1421 = smul.addr %s1418, 8
          %s1422 = scalar_lea.hbm %s5, %s1421
          %s1423 = sshll.u32 %s1414, 4
          %s1424 = int_to_ptr.vmem [resolvable:$true] %s1423
          %s1425 = sshll.u32 %s1422, 4
          %s1426 = int_to_ptr.hbm [resolvable:$true] %s1425
          %1431 = dma.vmem_to_hbm [thread:$0]  %s1424, 4096, %s1426, %s1411, 128, 128, 8
        $region56: #{tpu_custom_call.1} parent=39 // pred_fallthru
          _
      $region40: #{tpu_custom_call.1} parent=5 // pred_fallthru
        _
      %p1432 = scmp.le.s32.totalorder 2, %s18
      // Predicated region
      $region57: #{tpu_custom_call.1} parent=5 // pred_check
        %p1433 = pneg %p1432
      $region58: #{tpu_custom_call.1} parent=5 // pred_check_branch
        %1435 = sbr.rel (%p1433) target = $region60
      $region59: #{tpu_custom_call.1} parent=5 // pred_region
        %s1436 = ssub.s32 %s18, 2
        // Predicated region
        $region61: #{tpu_custom_call.1} parent=59 // pred_check
          %p1437 = pneg %p157
        $region62: #{tpu_custom_call.1} parent=59 // pred_check_branch
          %1439 = sbr.rel (%p1437) target = $region64
        $region63: #{tpu_custom_call.1} parent=59 // pred_region
          %s1440 = sand.u32 %s142, 1
          %s1441 = scalar_lea.sflag [#allocation4], %s1440
          %s1442 = sand.u32 %s142, 1
          %s1443 = smul.addr %s1442, 256
          %s1444 = scalar_lea.vmem [#allocation8], %s1443
          %1446 = dma.done %s1441, 4096
        $region64: #{tpu_custom_call.1} parent=59 // pred_fallthru
          _
      $region60: #{tpu_custom_call.1} parent=5 // pred_fallthru
        _
    $region6: #{tpu_custom_call.1} parent=1 // loop_footer
      %s22 = sadd.s32 1, %s18
    $region7: #{tpu_custom_call.1} parent=1 // loop_footer_branch
      %17 = sbr.rel target = $region3
    $region8: #{tpu_custom_call.1} parent=1 // loop_exit
      _
    %1447 = vsyncpa [#allocation3], 1
    %s1448 = scalar_lea.sflag [#allocation3], 1
    %1449 = vsyncpa %s1448, 1
    %1450 = vsyncpa [#allocation6], 1
    %1451 = vsyncpa [#allocation4], 1
    %s1452 = scalar_lea.sflag [#allocation4], 1
    %1453 = vsyncpa %s1452, 1

</llo_original>
